<compile_context>
chip_gen: v7x
topology: tpu7x:2x2x1
jax: 0.10.0
libtpu: 0.0.40
codegen_flags: <defaults>
</compile_context>

<pallas_src>
import functools

import jax
import jax.numpy as jnp
from jax.experimental import pallas as pl
from jax.experimental.pallas import tpu as pltpu


# ----------------------------------------------------------------------------
# Fused Pallas kernel: num_layers LSTM layers + FC head
# ----------------------------------------------------------------------------
def _fused_lstm_head_kernel(*refs, num_layers):
    """Ref layout (positional):
        refs[0]                      x_ref   (B, T, Din)  batch-first input
        refs[1+3l : 4+3l]            (wih, whh, b) for LSTM layer l
                                       wih (Din_l, 4H), whh (H, 4H), b (1, 4H)
        refs[1+3L : 5+3L]            w1 (H, H2), b1 (1, H2), w2 (H2, C), b2 (1, C)
        refs[5+3L]                   o_ref   (B, C) logits
        refs[6+3L]                   hseq_sc (T*B, H) VMEM scratch (inter-layer seq)
    """
    x_ref = refs[0]
    lstm_refs = refs[1:1 + 3 * num_layers]
    w1_ref, b1_ref, w2_ref, b2_ref = refs[1 + 3 * num_layers:5 + 3 * num_layers]
    o_ref = refs[5 + 3 * num_layers]
    hseq_sc = refs[6 + 3 * num_layers]

    B, T, _ = x_ref.shape
    H = lstm_refs[1].shape[0]                       # W_hh is (H, 4H)

    # Batch-first -> time-major reorder done in VMEM with static slices
    # (no extra XLA transpose pass over HBM in the wrapper).
    xv = x_ref[...]                                 # (B, T, Din)
    x_tm = jnp.concatenate([xv[:, t, :] for t in range(T)], axis=0)   # (T*B, Din)

    seq_in = x_tm
    h = jnp.zeros((B, H), jnp.float32)
    c = jnp.zeros((B, H), jnp.float32)

    for layer in range(num_layers):
        wih = lstm_refs[3 * layer][...]             # (Din_l, 4H)
        whh = lstm_refs[3 * layer + 1][...]         # (H, 4H)
        bias = lstm_refs[3 * layer + 2][...]        # (1, 4H) = b_ih + b_hh
        last_layer = layer == num_layers - 1

        # Hoisted whole-sequence input projection + bias: one big MXU matmul
        # instead of T tiny ones inside the recurrence.
        gx = jnp.dot(seq_in, wih, preferred_element_type=jnp.float32) + bias  # (T*B, 4H)

        h = jnp.zeros((B, H), jnp.float32)
        c = jnp.zeros((B, H), jnp.float32)

        for t in range(T):                          # fully unrolled serial recurrence
            gates = gx[t * B:(t + 1) * B, :] + jnp.dot(
                h, whh, preferred_element_type=jnp.float32)   # (B, 4H) order i,f,g,o
            sig = jax.nn.sigmoid(gates)             # one full-width EUP pass
            tah = jnp.tanh(gates)                   # one full-width EUP pass
            i_g = sig[:, 0 * H:1 * H]
            f_g = sig[:, 1 * H:2 * H]
            g_g = tah[:, 2 * H:3 * H]
            o_g = sig[:, 3 * H:4 * H]
            c = f_g * c + i_g * g_g
            h = o_g * jnp.tanh(c)
            if not last_layer:
                hseq_sc[t * B:(t + 1) * B, :] = h   # stays in VMEM, never hits HBM

        if not last_layer:
            # inter-layer dropout (p=0.2) is identity in eval mode
            seq_in = hseq_sc[...]                   # (T*B, H) time-major

    # FC head on the final hidden state only.
    z = jnp.dot(h, w1_ref[...], preferred_element_type=jnp.float32) + b1_ref[...]
    z = jnp.maximum(z, 0.0)                         # ReLU; Dropout(0.3) identity in eval
    o_ref[...] = jnp.dot(z, w2_ref[...], preferred_element_type=jnp.float32) + b2_ref[...]


# ----------------------------------------------------------------------------
# Wrapper
# ----------------------------------------------------------------------------
@jax.jit
def activity_classifier_forward(x, params):
    """x: (B, T, D) batch_first (same as the PyTorch module). Returns (B, C)."""
    lstm_params = params["lstm"]
    w1_t, b1, w2_t, b2 = params["fc"]
    num_layers = len(lstm_params)

    B, T, _ = x.shape
    H = lstm_params[0][1].shape[0]
    C = w2_t.shape[1]

    # Pad batch to a multiple of 8 (f32 sublane) so vector/MXU ops are not
    # running at 2/8 occupancy; padded rows are discarded on the way out.
    B_pad = ((B + 7) // 8) * 8
    x_p = x.astype(jnp.float32)
    if B_pad != B:
        x_p = jnp.pad(x_p, ((0, B_pad - B), (0, 0), (0, 0)))

    flat_inputs = [x_p]
    for layer_p in lstm_params:
        flat_inputs.extend(layer_p)
    flat_inputs.extend((w1_t, b1, w2_t, b2))

    out = pl.pallas_call(
        functools.partial(_fused_lstm_head_kernel, num_layers=num_layers),
        out_shape=jax.ShapeDtypeStruct((B_pad, C), jnp.float32),
        in_specs=[pl.BlockSpec(memory_space=pltpu.MemorySpace.VMEM)] * len(flat_inputs),
        out_specs=pl.BlockSpec(memory_space=pltpu.MemorySpace.VMEM),
        scratch_shapes=[pltpu.VMEM((T * B_pad, H), jnp.float32)],
    )(*flat_inputs)
    return out[:B]


# ----------------------------------------------------------------------------
# Deterministic parameter construction (matches nn.LSTM / nn.Linear shapes)
# ----------------------------------------------------------------------------
def init_params(key, input_size, hidden_size, num_layers, num_classes):
    H = hidden_size
    H2 = hidden_size // 2
    bound = 1.0 / jnp.sqrt(jnp.float32(H))

    def unif(k, shape, b):
        return jax.random.uniform(k, shape, jnp.float32, minval=-b, maxval=b)

    lstm_params = []
    for layer in range(num_layers):
        din = input_size if layer == 0 else H
        key, k1, k2, k3, k4 = jax.random.split(key, 5)
        w_ih = unif(k1, (4 * H, din), bound)        # PyTorch shape (4H, Din)
        w_hh = unif(k2, (4 * H, H), bound)          # PyTorch shape (4H, H)
        b_ih = unif(k3, (4 * H,), bound)
        b_hh = unif(k4, (4 * H,), bound)
        lstm_params.append((w_ih.T, w_hh.T, (b_ih + b_hh).reshape(1, 4 * H)))

    key, k1, k2, k3, k4 = jax.random.split(key, 5)
    b1lim = 1.0 / jnp.sqrt(jnp.float32(H))
    b2lim = 1.0 / jnp.sqrt(jnp.float32(H2))
    w1 = unif(k1, (H2, H), b1lim)                   # PyTorch Linear weight (out, in)
    b1 = unif(k2, (H2,), b1lim)
    w2 = unif(k3, (num_classes, H2), b2lim)
    b2 = unif(k4, (num_classes,), b2lim)
    fc_params = (w1.T, b1.reshape(1, H2), w2.T, b2.reshape(1, num_classes))

    return {"lstm": tuple(lstm_params), "fc": fc_params}


# ----------------------------------------------------------------------------
# Pure-JAX reference (same math) used as an in-script correctness check
# ----------------------------------------------------------------------------
def _reference_forward(x, params):
    hp = jax.lax.Precision.HIGHEST
    h_seq = x.astype(jnp.float32)
    for (wih_t, whh_t, b) in params["lstm"]:
        B, _, _ = h_seq.shape
        H = whh_t.shape[0]

        def step(carry, xt):
            h, c = carry
            gates = (jnp.dot(xt, wih_t, precision=hp)
                     + jnp.dot(h, whh_t, precision=hp) + b[0])
            i = jax.nn.sigmoid(gates[:, 0 * H:1 * H])
            f = jax.nn.sigmoid(gates[:, 1 * H:2 * H])
            g = jnp.tanh(gates[:, 2 * H:3 * H])
            o = jax.nn.sigmoid(gates[:, 3 * H:4 * H])
            c = f * c + i * g
            h = o * jnp.tanh(c)
            return (h, c), h

        xs = jnp.transpose(h_seq, (1, 0, 2))
        (_, _), ys = jax.lax.scan(
            step, (jnp.zeros((B, H), jnp.float32), jnp.zeros((B, H), jnp.float32)), xs)
        h_seq = jnp.transpose(ys, (1, 0, 2))
    h_last = h_seq[:, -1, :]
    w1, b1, w2, b2 = params["fc"]
    z = jnp.maximum(jnp.dot(h_last, w1, precision=hp) + b1, 0.0)
    return jnp.dot(z, w2, precision=hp) + b2


# ----------------------------------------------------------------------------
if __name__ == "__main__":
    B, T = 2, 8                 # batch, sequence length
    INPUT_SIZE = 4              # per-timestep feature dim
    HIDDEN = 32
    NUM_LAYERS = 2
    NUM_CLASSES = 6

    key = jax.random.PRNGKey(0)
    key, kx, kp = jax.random.split(key, 3)

    x = jax.random.normal(kx, (B, T, INPUT_SIZE), jnp.float32)
    params = init_params(kp, INPUT_SIZE, HIDDEN, NUM_LAYERS, NUM_CLASSES)

    out = activity_classifier_forward(x, params)
    out = jax.block_until_ready(out)

    assert out.shape == (B, NUM_CLASSES), out.shape
    assert out.dtype == jnp.float32

    ref = jax.block_until_ready(_reference_forward(x, params))
    max_err = float(jnp.max(jnp.abs(out - ref)))
    # tolerance accounts for TPU matmul precision differences only
    assert max_err < 1e-2, f"mismatch vs reference, max_err={max_err}"

    print("KERNEL_OK")
</pallas_src>

<mosaic_0001>
module attributes {stable_mosaic.version = 11 : i64} {
  func.func @_fused_lstm_head_kernel(%arg0: memref<8x8x4xf32, #tpu.memory_space<vmem>>, %arg1: memref<4x128xf32, #tpu.memory_space<vmem>>, %arg2: memref<32x128xf32, #tpu.memory_space<vmem>>, %arg3: memref<1x128xf32, #tpu.memory_space<vmem>>, %arg4: memref<32x128xf32, #tpu.memory_space<vmem>>, %arg5: memref<32x128xf32, #tpu.memory_space<vmem>>, %arg6: memref<1x128xf32, #tpu.memory_space<vmem>>, %arg7: memref<32x16xf32, #tpu.memory_space<vmem>>, %arg8: memref<1x16xf32, #tpu.memory_space<vmem>>, %arg9: memref<16x6xf32, #tpu.memory_space<vmem>>, %arg10: memref<1x6xf32, #tpu.memory_space<vmem>>, %arg11: memref<8x6xf32, #tpu.memory_space<vmem>>, %arg12: memref<64x32xf32, #tpu.memory_space<vmem>>) attributes {dimension_semantics = [], scalar_prefetch = 0 : i64, scratch_operands = 1 : i64, tpu.core_type = #tpu.core_type<tc>} {
    %c0 = arith.constant 0 : index
    %c0_0 = arith.constant 0 : index
    %c0_1 = arith.constant 0 : index
    %0 = vector.load %arg0[%c0, %c0_0, %c0_1] : memref<8x8x4xf32, #tpu.memory_space<vmem>>, vector<8x8x4xf32>
    %1 = vector.extract_strided_slice %0 {offsets = [0, 0, 0], sizes = [8, 1, 4], strides = [1, 1, 1]} : vector<8x8x4xf32> to vector<8x1x4xf32>
    %2 = vector.shape_cast %1 : vector<8x1x4xf32> to vector<8x4xf32>
    %3 = vector.extract_strided_slice %0 {offsets = [0, 1, 0], sizes = [8, 1, 4], strides = [1, 1, 1]} : vector<8x8x4xf32> to vector<8x1x4xf32>
    %4 = vector.shape_cast %3 : vector<8x1x4xf32> to vector<8x4xf32>
    %5 = vector.extract_strided_slice %0 {offsets = [0, 2, 0], sizes = [8, 1, 4], strides = [1, 1, 1]} : vector<8x8x4xf32> to vector<8x1x4xf32>
    %6 = vector.shape_cast %5 : vector<8x1x4xf32> to vector<8x4xf32>
    %7 = vector.extract_strided_slice %0 {offsets = [0, 3, 0], sizes = [8, 1, 4], strides = [1, 1, 1]} : vector<8x8x4xf32> to vector<8x1x4xf32>
    %8 = vector.shape_cast %7 : vector<8x1x4xf32> to vector<8x4xf32>
    %9 = vector.extract_strided_slice %0 {offsets = [0, 4, 0], sizes = [8, 1, 4], strides = [1, 1, 1]} : vector<8x8x4xf32> to vector<8x1x4xf32>
    %10 = vector.shape_cast %9 : vector<8x1x4xf32> to vector<8x4xf32>
    %11 = vector.extract_strided_slice %0 {offsets = [0, 5, 0], sizes = [8, 1, 4], strides = [1, 1, 1]} : vector<8x8x4xf32> to vector<8x1x4xf32>
    %12 = vector.shape_cast %11 : vector<8x1x4xf32> to vector<8x4xf32>
    %13 = vector.extract_strided_slice %0 {offsets = [0, 6, 0], sizes = [8, 1, 4], strides = [1, 1, 1]} : vector<8x8x4xf32> to vector<8x1x4xf32>
    %14 = vector.shape_cast %13 : vector<8x1x4xf32> to vector<8x4xf32>
    %15 = vector.extract_strided_slice %0 {offsets = [0, 7, 0], sizes = [8, 1, 4], strides = [1, 1, 1]} : vector<8x8x4xf32> to vector<8x1x4xf32>
    %16 = vector.shape_cast %15 : vector<8x1x4xf32> to vector<8x4xf32>
    %17 = tpu.concatenate %2, %4, %6, %8, %10, %12, %14, %16 in 0 : vector<8x4xf32>, vector<8x4xf32>, vector<8x4xf32>, vector<8x4xf32>, vector<8x4xf32>, vector<8x4xf32>, vector<8x4xf32>, vector<8x4xf32> -> vector<64x4xf32>
    %c0_2 = arith.constant 0 : index
    %c0_3 = arith.constant 0 : index
    %18 = vector.load %arg1[%c0_2, %c0_3] : memref<4x128xf32, #tpu.memory_space<vmem>>, vector<4x128xf32>
    %c0_4 = arith.constant 0 : index
    %c0_5 = arith.constant 0 : index
    %19 = vector.load %arg2[%c0_4, %c0_5] : memref<32x128xf32, #tpu.memory_space<vmem>>, vector<32x128xf32>
    %c0_6 = arith.constant 0 : index
    %c0_7 = arith.constant 0 : index
    %20 = vector.load %arg3[%c0_6, %c0_7] : memref<1x128xf32, #tpu.memory_space<vmem>>, vector<1x128xf32>
    %cst = arith.constant dense<0.000000e+00> : vector<64x128xf32>
    %21 = tpu.matmul %17, %18, %cst {dimension_numbers = #tpu.dot_dimension_numbers<[1], [0], [0], [1], [0, 0, 1, 1], [], []>} : vector<64x4xf32>, vector<4x128xf32>, vector<64x128xf32> -> vector<64x128xf32>
    %22 = vector.broadcast %20 : vector<1x128xf32> to vector<64x128xf32>
    %23 = arith.addf %21, %22 : vector<64x128xf32>
    %cst_8 = arith.constant 0.000000e+00 : f32
    %24 = vector.broadcast %cst_8 : f32 to vector<8x32xf32>
    %cst_9 = arith.constant 0.000000e+00 : f32
    %25 = vector.broadcast %cst_9 : f32 to vector<8x32xf32>
    %26 = vector.extract_strided_slice %23 {offsets = [0, 0], sizes = [8, 128], strides = [1, 1]} : vector<64x128xf32> to vector<8x128xf32>
    %cst_10 = arith.constant dense<0.000000e+00> : vector<8x128xf32>
    %27 = tpu.matmul %24, %19, %cst_10 {dimension_numbers = #tpu.dot_dimension_numbers<[1], [0], [0], [1], [0, 0, 1, 1], [], []>} : vector<8x32xf32>, vector<32x128xf32>, vector<8x128xf32> -> vector<8x128xf32>
    %28 = arith.addf %26, %27 : vector<8x128xf32>
    %29 = arith.negf %28 : vector<8x128xf32>
    %30 = math.exp %29 : vector<8x128xf32>
    %cst_11 = arith.constant 1.000000e+00 : f32
    %31 = vector.broadcast %cst_11 : f32 to vector<8x128xf32>
    %32 = arith.addf %31, %30 : vector<8x128xf32>
    %33 = arith.divf %31, %32 : vector<8x128xf32>
    %34 = math.tanh %28 : vector<8x128xf32>
    %35 = vector.extract_strided_slice %33 {offsets = [0, 0], sizes = [8, 32], strides = [1, 1]} : vector<8x128xf32> to vector<8x32xf32>
    %36 = vector.extract_strided_slice %33 {offsets = [0, 32], sizes = [8, 32], strides = [1, 1]} : vector<8x128xf32> to vector<8x32xf32>
    %37 = vector.extract_strided_slice %34 {offsets = [0, 64], sizes = [8, 32], strides = [1, 1]} : vector<8x128xf32> to vector<8x32xf32>
    %38 = vector.extract_strided_slice %33 {offsets = [0, 96], sizes = [8, 32], strides = [1, 1]} : vector<8x128xf32> to vector<8x32xf32>
    %39 = arith.mulf %36, %25 : vector<8x32xf32>
    %40 = arith.mulf %35, %37 : vector<8x32xf32>
    %41 = arith.addf %39, %40 : vector<8x32xf32>
    %42 = math.tanh %41 : vector<8x32xf32>
    %43 = arith.mulf %38, %42 : vector<8x32xf32>
    %c0_12 = arith.constant 0 : index
    %c0_13 = arith.constant 0 : index
    %44 = vector.load %arg12[%c0_12, %c0_13] : memref<64x32xf32, #tpu.memory_space<vmem>>, vector<8x32xf32>
    tpu.vector_store %arg12[%c0_12, %c0_13], %43 {strides = array<i32>} : memref<64x32xf32, #tpu.memory_space<vmem>>, vector<8x32xf32>,
    %45 = vector.extract_strided_slice %23 {offsets = [8, 0], sizes = [8, 128], strides = [1, 1]} : vector<64x128xf32> to vector<8x128xf32>
    %cst_14 = arith.constant dense<0.000000e+00> : vector<8x128xf32>
    %46 = tpu.matmul %43, %19, %cst_14 {dimension_numbers = #tpu.dot_dimension_numbers<[1], [0], [0], [1], [0, 0, 1, 1], [], []>} : vector<8x32xf32>, vector<32x128xf32>, vector<8x128xf32> -> vector<8x128xf32>
    %47 = arith.addf %45, %46 : vector<8x128xf32>
    %48 = arith.negf %47 : vector<8x128xf32>
    %49 = math.exp %48 : vector<8x128xf32>
    %cst_15 = arith.constant 1.000000e+00 : f32
    %50 = vector.broadcast %cst_15 : f32 to vector<8x128xf32>
    %51 = arith.addf %50, %49 : vector<8x128xf32>
    %52 = arith.divf %50, %51 : vector<8x128xf32>
    %53 = math.tanh %47 : vector<8x128xf32>
    %54 = vector.extract_strided_slice %52 {offsets = [0, 0], sizes = [8, 32], strides = [1, 1]} : vector<8x128xf32> to vector<8x32xf32>
    %55 = vector.extract_strided_slice %52 {offsets = [0, 32], sizes = [8, 32], strides = [1, 1]} : vector<8x128xf32> to vector<8x32xf32>
    %56 = vector.extract_strided_slice %53 {offsets = [0, 64], sizes = [8, 32], strides = [1, 1]} : vector<8x128xf32> to vector<8x32xf32>
    %57 = vector.extract_strided_slice %52 {offsets = [0, 96], sizes = [8, 32], strides = [1, 1]} : vector<8x128xf32> to vector<8x32xf32>
    %58 = arith.mulf %55, %41 : vector<8x32xf32>
    %59 = arith.mulf %54, %56 : vector<8x32xf32>
    %60 = arith.addf %58, %59 : vector<8x32xf32>
    %61 = math.tanh %60 : vector<8x32xf32>
    %62 = arith.mulf %57, %61 : vector<8x32xf32>
    %c8 = arith.constant 8 : index
    %c0_16 = arith.constant 0 : index
    %63 = vector.load %arg12[%c8, %c0_16] : memref<64x32xf32, #tpu.memory_space<vmem>>, vector<8x32xf32>
    tpu.vector_store %arg12[%c8, %c0_16], %62 {strides = array<i32>} : memref<64x32xf32, #tpu.memory_space<vmem>>, vector<8x32xf32>,
    %64 = vector.extract_strided_slice %23 {offsets = [16, 0], sizes = [8, 128], strides = [1, 1]} : vector<64x128xf32> to vector<8x128xf32>
    %cst_17 = arith.constant dense<0.000000e+00> : vector<8x128xf32>
    %65 = tpu.matmul %62, %19, %cst_17 {dimension_numbers = #tpu.dot_dimension_numbers<[1], [0], [0], [1], [0, 0, 1, 1], [], []>} : vector<8x32xf32>, vector<32x128xf32>, vector<8x128xf32> -> vector<8x128xf32>
    %66 = arith.addf %64, %65 : vector<8x128xf32>
    %67 = arith.negf %66 : vector<8x128xf32>
    %68 = math.exp %67 : vector<8x128xf32>
    %cst_18 = arith.constant 1.000000e+00 : f32
    %69 = vector.broadcast %cst_18 : f32 to vector<8x128xf32>
    %70 = arith.addf %69, %68 : vector<8x128xf32>
    %71 = arith.divf %69, %70 : vector<8x128xf32>
    %72 = math.tanh %66 : vector<8x128xf32>
    %73 = vector.extract_strided_slice %71 {offsets = [0, 0], sizes = [8, 32], strides = [1, 1]} : vector<8x128xf32> to vector<8x32xf32>
    %74 = vector.extract_strided_slice %71 {offsets = [0, 32], sizes = [8, 32], strides = [1, 1]} : vector<8x128xf32> to vector<8x32xf32>
    %75 = vector.extract_strided_slice %72 {offsets = [0, 64], sizes = [8, 32], strides = [1, 1]} : vector<8x128xf32> to vector<8x32xf32>
    %76 = vector.extract_strided_slice %71 {offsets = [0, 96], sizes = [8, 32], strides = [1, 1]} : vector<8x128xf32> to vector<8x32xf32>
    %77 = arith.mulf %74, %60 : vector<8x32xf32>
    %78 = arith.mulf %73, %75 : vector<8x32xf32>
    %79 = arith.addf %77, %78 : vector<8x32xf32>
    %80 = math.tanh %79 : vector<8x32xf32>
    %81 = arith.mulf %76, %80 : vector<8x32xf32>
    %c16 = arith.constant 16 : index
    %c0_19 = arith.constant 0 : index
    %82 = vector.load %arg12[%c16, %c0_19] : memref<64x32xf32, #tpu.memory_space<vmem>>, vector<8x32xf32>
    tpu.vector_store %arg12[%c16, %c0_19], %81 {strides = array<i32>} : memref<64x32xf32, #tpu.memory_space<vmem>>, vector<8x32xf32>,
    %83 = vector.extract_strided_slice %23 {offsets = [24, 0], sizes = [8, 128], strides = [1, 1]} : vector<64x128xf32> to vector<8x128xf32>
    %cst_20 = arith.constant dense<0.000000e+00> : vector<8x128xf32>
    %84 = tpu.matmul %81, %19, %cst_20 {dimension_numbers = #tpu.dot_dimension_numbers<[1], [0], [0], [1], [0, 0, 1, 1], [], []>} : vector<8x32xf32>, vector<32x128xf32>, vector<8x128xf32> -> vector<8x128xf32>
    %85 = arith.addf %83, %84 : vector<8x128xf32>
    %86 = arith.negf %85 : vector<8x128xf32>
    %87 = math.exp %86 : vector<8x128xf32>
    %cst_21 = arith.constant 1.000000e+00 : f32
    %88 = vector.broadcast %cst_21 : f32 to vector<8x128xf32>
    %89 = arith.addf %88, %87 : vector<8x128xf32>
    %90 = arith.divf %88, %89 : vector<8x128xf32>
    %91 = math.tanh %85 : vector<8x128xf32>
    %92 = vector.extract_strided_slice %90 {offsets = [0, 0], sizes = [8, 32], strides = [1, 1]} : vector<8x128xf32> to vector<8x32xf32>
    %93 = vector.extract_strided_slice %90 {offsets = [0, 32], sizes = [8, 32], strides = [1, 1]} : vector<8x128xf32> to vector<8x32xf32>
    %94 = vector.extract_strided_slice %91 {offsets = [0, 64], sizes = [8, 32], strides = [1, 1]} : vector<8x128xf32> to vector<8x32xf32>
    %95 = vector.extract_strided_slice %90 {offsets = [0, 96], sizes = [8, 32], strides = [1, 1]} : vector<8x128xf32> to vector<8x32xf32>
    %96 = arith.mulf %93, %79 : vector<8x32xf32>
    %97 = arith.mulf %92, %94 : vector<8x32xf32>
    %98 = arith.addf %96, %97 : vector<8x32xf32>
    %99 = math.tanh %98 : vector<8x32xf32>
    %100 = arith.mulf %95, %99 : vector<8x32xf32>
    %c24 = arith.constant 24 : index
    %c0_22 = arith.constant 0 : index
    %101 = vector.load %arg12[%c24, %c0_22] : memref<64x32xf32, #tpu.memory_space<vmem>>, vector<8x32xf32>
    tpu.vector_store %arg12[%c24, %c0_22], %100 {strides = array<i32>} : memref<64x32xf32, #tpu.memory_space<vmem>>, vector<8x32xf32>,
    %102 = vector.extract_strided_slice %23 {offsets = [32, 0], sizes = [8, 128], strides = [1, 1]} : vector<64x128xf32> to vector<8x128xf32>
    %cst_23 = arith.constant dense<0.000000e+00> : vector<8x128xf32>
    %103 = tpu.matmul %100, %19, %cst_23 {dimension_numbers = #tpu.dot_dimension_numbers<[1], [0], [0], [1], [0, 0, 1, 1], [], []>} : vector<8x32xf32>, vector<32x128xf32>, vector<8x128xf32> -> vector<8x128xf32>
    %104 = arith.addf %102, %103 : vector<8x128xf32>
    %105 = arith.negf %104 : vector<8x128xf32>
    %106 = math.exp %105 : vector<8x128xf32>
    %cst_24 = arith.constant 1.000000e+00 : f32
    %107 = vector.broadcast %cst_24 : f32 to vector<8x128xf32>
    %108 = arith.addf %107, %106 : vector<8x128xf32>
    %109 = arith.divf %107, %108 : vector<8x128xf32>
    %110 = math.tanh %104 : vector<8x128xf32>
    %111 = vector.extract_strided_slice %109 {offsets = [0, 0], sizes = [8, 32], strides = [1, 1]} : vector<8x128xf32> to vector<8x32xf32>
    %112 = vector.extract_strided_slice %109 {offsets = [0, 32], sizes = [8, 32], strides = [1, 1]} : vector<8x128xf32> to vector<8x32xf32>
    %113 = vector.extract_strided_slice %110 {offsets = [0, 64], sizes = [8, 32], strides = [1, 1]} : vector<8x128xf32> to vector<8x32xf32>
    %114 = vector.extract_strided_slice %109 {offsets = [0, 96], sizes = [8, 32], strides = [1, 1]} : vector<8x128xf32> to vector<8x32xf32>
    %115 = arith.mulf %112, %98 : vector<8x32xf32>
    %116 = arith.mulf %111, %113 : vector<8x32xf32>
    %117 = arith.addf %115, %116 : vector<8x32xf32>
    %118 = math.tanh %117 : vector<8x32xf32>
    %119 = arith.mulf %114, %118 : vector<8x32xf32>
    %c32 = arith.constant 32 : index
    %c0_25 = arith.constant 0 : index
    %120 = vector.load %arg12[%c32, %c0_25] : memref<64x32xf32, #tpu.memory_space<vmem>>, vector<8x32xf32>
    tpu.vector_store %arg12[%c32, %c0_25], %119 {strides = array<i32>} : memref<64x32xf32, #tpu.memory_space<vmem>>, vector<8x32xf32>,
    %121 = vector.extract_strided_slice %23 {offsets = [40, 0], sizes = [8, 128], strides = [1, 1]} : vector<64x128xf32> to vector<8x128xf32>
    %cst_26 = arith.constant dense<0.000000e+00> : vector<8x128xf32>
    %122 = tpu.matmul %119, %19, %cst_26 {dimension_numbers = #tpu.dot_dimension_numbers<[1], [0], [0], [1], [0, 0, 1, 1], [], []>} : vector<8x32xf32>, vector<32x128xf32>, vector<8x128xf32> -> vector<8x128xf32>
    %123 = arith.addf %121, %122 : vector<8x128xf32>
    %124 = arith.negf %123 : vector<8x128xf32>
    %125 = math.exp %124 : vector<8x128xf32>
    %cst_27 = arith.constant 1.000000e+00 : f32
    %126 = vector.broadcast %cst_27 : f32 to vector<8x128xf32>
    %127 = arith.addf %126, %125 : vector<8x128xf32>
    %128 = arith.divf %126, %127 : vector<8x128xf32>
    %129 = math.tanh %123 : vector<8x128xf32>
    %130 = vector.extract_strided_slice %128 {offsets = [0, 0], sizes = [8, 32], strides = [1, 1]} : vector<8x128xf32> to vector<8x32xf32>
    %131 = vector.extract_strided_slice %128 {offsets = [0, 32], sizes = [8, 32], strides = [1, 1]} : vector<8x128xf32> to vector<8x32xf32>
    %132 = vector.extract_strided_slice %129 {offsets = [0, 64], sizes = [8, 32], strides = [1, 1]} : vector<8x128xf32> to vector<8x32xf32>
    %133 = vector.extract_strided_slice %128 {offsets = [0, 96], sizes = [8, 32], strides = [1, 1]} : vector<8x128xf32> to vector<8x32xf32>
    %134 = arith.mulf %131, %117 : vector<8x32xf32>
    %135 = arith.mulf %130, %132 : vector<8x32xf32>
    %136 = arith.addf %134, %135 : vector<8x32xf32>
    %137 = math.tanh %136 : vector<8x32xf32>
    %138 = arith.mulf %133, %137 : vector<8x32xf32>
    %c40 = arith.constant 40 : index
    %c0_28 = arith.constant 0 : index
    %139 = vector.load %arg12[%c40, %c0_28] : memref<64x32xf32, #tpu.memory_space<vmem>>, vector<8x32xf32>
    tpu.vector_store %arg12[%c40, %c0_28], %138 {strides = array<i32>} : memref<64x32xf32, #tpu.memory_space<vmem>>, vector<8x32xf32>,
    %140 = vector.extract_strided_slice %23 {offsets = [48, 0], sizes = [8, 128], strides = [1, 1]} : vector<64x128xf32> to vector<8x128xf32>
    %cst_29 = arith.constant dense<0.000000e+00> : vector<8x128xf32>
    %141 = tpu.matmul %138, %19, %cst_29 {dimension_numbers = #tpu.dot_dimension_numbers<[1], [0], [0], [1], [0, 0, 1, 1], [], []>} : vector<8x32xf32>, vector<32x128xf32>, vector<8x128xf32> -> vector<8x128xf32>
    %142 = arith.addf %140, %141 : vector<8x128xf32>
    %143 = arith.negf %142 : vector<8x128xf32>
    %144 = math.exp %143 : vector<8x128xf32>
    %cst_30 = arith.constant 1.000000e+00 : f32
    %145 = vector.broadcast %cst_30 : f32 to vector<8x128xf32>
    %146 = arith.addf %145, %144 : vector<8x128xf32>
    %147 = arith.divf %145, %146 : vector<8x128xf32>
    %148 = math.tanh %142 : vector<8x128xf32>
    %149 = vector.extract_strided_slice %147 {offsets = [0, 0], sizes = [8, 32], strides = [1, 1]} : vector<8x128xf32> to vector<8x32xf32>
    %150 = vector.extract_strided_slice %147 {offsets = [0, 32], sizes = [8, 32], strides = [1, 1]} : vector<8x128xf32> to vector<8x32xf32>
    %151 = vector.extract_strided_slice %148 {offsets = [0, 64], sizes = [8, 32], strides = [1, 1]} : vector<8x128xf32> to vector<8x32xf32>
    %152 = vector.extract_strided_slice %147 {offsets = [0, 96], sizes = [8, 32], strides = [1, 1]} : vector<8x128xf32> to vector<8x32xf32>
    %153 = arith.mulf %150, %136 : vector<8x32xf32>
    %154 = arith.mulf %149, %151 : vector<8x32xf32>
    %155 = arith.addf %153, %154 : vector<8x32xf32>
    %156 = math.tanh %155 : vector<8x32xf32>
    %157 = arith.mulf %152, %156 : vector<8x32xf32>
    %c48 = arith.constant 48 : index
    %c0_31 = arith.constant 0 : index
    %158 = vector.load %arg12[%c48, %c0_31] : memref<64x32xf32, #tpu.memory_space<vmem>>, vector<8x32xf32>
    tpu.vector_store %arg12[%c48, %c0_31], %157 {strides = array<i32>} : memref<64x32xf32, #tpu.memory_space<vmem>>, vector<8x32xf32>,
    %159 = vector.extract_strided_slice %23 {offsets = [56, 0], sizes = [8, 128], strides = [1, 1]} : vector<64x128xf32> to vector<8x128xf32>
    %cst_32 = arith.constant dense<0.000000e+00> : vector<8x128xf32>
    %160 = tpu.matmul %157, %19, %cst_32 {dimension_numbers = #tpu.dot_dimension_numbers<[1], [0], [0], [1], [0, 0, 1, 1], [], []>} : vector<8x32xf32>, vector<32x128xf32>, vector<8x128xf32> -> vector<8x128xf32>
    %161 = arith.addf %159, %160 : vector<8x128xf32>
    %162 = arith.negf %161 : vector<8x128xf32>
    %163 = math.exp %162 : vector<8x128xf32>
    %cst_33 = arith.constant 1.000000e+00 : f32
    %164 = vector.broadcast %cst_33 : f32 to vector<8x128xf32>
    %165 = arith.addf %164, %163 : vector<8x128xf32>
    %166 = arith.divf %164, %165 : vector<8x128xf32>
    %167 = math.tanh %161 : vector<8x128xf32>
    %168 = vector.extract_strided_slice %166 {offsets = [0, 0], sizes = [8, 32], strides = [1, 1]} : vector<8x128xf32> to vector<8x32xf32>
    %169 = vector.extract_strided_slice %166 {offsets = [0, 32], sizes = [8, 32], strides = [1, 1]} : vector<8x128xf32> to vector<8x32xf32>
    %170 = vector.extract_strided_slice %167 {offsets = [0, 64], sizes = [8, 32], strides = [1, 1]} : vector<8x128xf32> to vector<8x32xf32>
    %171 = vector.extract_strided_slice %166 {offsets = [0, 96], sizes = [8, 32], strides = [1, 1]} : vector<8x128xf32> to vector<8x32xf32>
    %172 = arith.mulf %169, %155 : vector<8x32xf32>
    %173 = arith.mulf %168, %170 : vector<8x32xf32>
    %174 = arith.addf %172, %173 : vector<8x32xf32>
    %175 = math.tanh %174 : vector<8x32xf32>
    %176 = arith.mulf %171, %175 : vector<8x32xf32>
    %c56 = arith.constant 56 : index
    %c0_34 = arith.constant 0 : index
    %177 = vector.load %arg12[%c56, %c0_34] : memref<64x32xf32, #tpu.memory_space<vmem>>, vector<8x32xf32>
    tpu.vector_store %arg12[%c56, %c0_34], %176 {strides = array<i32>} : memref<64x32xf32, #tpu.memory_space<vmem>>, vector<8x32xf32>,
    %c0_35 = arith.constant 0 : index
    %c0_36 = arith.constant 0 : index
    %178 = vector.load %arg12[%c0_35, %c0_36] : memref<64x32xf32, #tpu.memory_space<vmem>>, vector<64x32xf32>
    %c0_37 = arith.constant 0 : index
    %c0_38 = arith.constant 0 : index
    %179 = vector.load %arg4[%c0_37, %c0_38] : memref<32x128xf32, #tpu.memory_space<vmem>>, vector<32x128xf32>
    %c0_39 = arith.constant 0 : index
    %c0_40 = arith.constant 0 : index
    %180 = vector.load %arg5[%c0_39, %c0_40] : memref<32x128xf32, #tpu.memory_space<vmem>>, vector<32x128xf32>
    %c0_41 = arith.constant 0 : index
    %c0_42 = arith.constant 0 : index
    %181 = vector.load %arg6[%c0_41, %c0_42] : memref<1x128xf32, #tpu.memory_space<vmem>>, vector<1x128xf32>
    %cst_43 = arith.constant dense<0.000000e+00> : vector<64x128xf32>
    %182 = tpu.matmul %178, %179, %cst_43 {dimension_numbers = #tpu.dot_dimension_numbers<[1], [0], [0], [1], [0, 0, 1, 1], [], []>} : vector<64x32xf32>, vector<32x128xf32>, vector<64x128xf32> -> vector<64x128xf32>
    %183 = vector.broadcast %181 : vector<1x128xf32> to vector<64x128xf32>
    %184 = arith.addf %182, %183 : vector<64x128xf32>
    %cst_44 = arith.constant 0.000000e+00 : f32
    %185 = vector.broadcast %cst_44 : f32 to vector<8x32xf32>
    %cst_45 = arith.constant 0.000000e+00 : f32
    %186 = vector.broadcast %cst_45 : f32 to vector<8x32xf32>
    %187 = vector.extract_strided_slice %184 {offsets = [0, 0], sizes = [8, 128], strides = [1, 1]} : vector<64x128xf32> to vector<8x128xf32>
    %cst_46 = arith.constant dense<0.000000e+00> : vector<8x128xf32>
    %188 = tpu.matmul %185, %180, %cst_46 {dimension_numbers = #tpu.dot_dimension_numbers<[1], [0], [0], [1], [0, 0, 1, 1], [], []>} : vector<8x32xf32>, vector<32x128xf32>, vector<8x128xf32> -> vector<8x128xf32>
    %189 = arith.addf %187, %188 : vector<8x128xf32>
    %190 = arith.negf %189 : vector<8x128xf32>
    %191 = math.exp %190 : vector<8x128xf32>
    %cst_47 = arith.constant 1.000000e+00 : f32
    %192 = vector.broadcast %cst_47 : f32 to vector<8x128xf32>
    %193 = arith.addf %192, %191 : vector<8x128xf32>
    %194 = arith.divf %192, %193 : vector<8x128xf32>
    %195 = math.tanh %189 : vector<8x128xf32>
    %196 = vector.extract_strided_slice %194 {offsets = [0, 0], sizes = [8, 32], strides = [1, 1]} : vector<8x128xf32> to vector<8x32xf32>
    %197 = vector.extract_strided_slice %194 {offsets = [0, 32], sizes = [8, 32], strides = [1, 1]} : vector<8x128xf32> to vector<8x32xf32>
    %198 = vector.extract_strided_slice %195 {offsets = [0, 64], sizes = [8, 32], strides = [1, 1]} : vector<8x128xf32> to vector<8x32xf32>
    %199 = vector.extract_strided_slice %194 {offsets = [0, 96], sizes = [8, 32], strides = [1, 1]} : vector<8x128xf32> to vector<8x32xf32>
    %200 = arith.mulf %197, %186 : vector<8x32xf32>
    %201 = arith.mulf %196, %198 : vector<8x32xf32>
    %202 = arith.addf %200, %201 : vector<8x32xf32>
    %203 = math.tanh %202 : vector<8x32xf32>
    %204 = arith.mulf %199, %203 : vector<8x32xf32>
    %205 = vector.extract_strided_slice %184 {offsets = [8, 0], sizes = [8, 128], strides = [1, 1]} : vector<64x128xf32> to vector<8x128xf32>
    %cst_48 = arith.constant dense<0.000000e+00> : vector<8x128xf32>
    %206 = tpu.matmul %204, %180, %cst_48 {dimension_numbers = #tpu.dot_dimension_numbers<[1], [0], [0], [1], [0, 0, 1, 1], [], []>} : vector<8x32xf32>, vector<32x128xf32>, vector<8x128xf32> -> vector<8x128xf32>
    %207 = arith.addf %205, %206 : vector<8x128xf32>
    %208 = arith.negf %207 : vector<8x128xf32>
    %209 = math.exp %208 : vector<8x128xf32>
    %cst_49 = arith.constant 1.000000e+00 : f32
    %210 = vector.broadcast %cst_49 : f32 to vector<8x128xf32>
    %211 = arith.addf %210, %209 : vector<8x128xf32>
    %212 = arith.divf %210, %211 : vector<8x128xf32>
    %213 = math.tanh %207 : vector<8x128xf32>
    %214 = vector.extract_strided_slice %212 {offsets = [0, 0], sizes = [8, 32], strides = [1, 1]} : vector<8x128xf32> to vector<8x32xf32>
    %215 = vector.extract_strided_slice %212 {offsets = [0, 32], sizes = [8, 32], strides = [1, 1]} : vector<8x128xf32> to vector<8x32xf32>
    %216 = vector.extract_strided_slice %213 {offsets = [0, 64], sizes = [8, 32], strides = [1, 1]} : vector<8x128xf32> to vector<8x32xf32>
    %217 = vector.extract_strided_slice %212 {offsets = [0, 96], sizes = [8, 32], strides = [1, 1]} : vector<8x128xf32> to vector<8x32xf32>
    %218 = arith.mulf %215, %202 : vector<8x32xf32>
    %219 = arith.mulf %214, %216 : vector<8x32xf32>
    %220 = arith.addf %218, %219 : vector<8x32xf32>
    %221 = math.tanh %220 : vector<8x32xf32>
    %222 = arith.mulf %217, %221 : vector<8x32xf32>
    %223 = vector.extract_strided_slice %184 {offsets = [16, 0], sizes = [8, 128], strides = [1, 1]} : vector<64x128xf32> to vector<8x128xf32>
    %cst_50 = arith.constant dense<0.000000e+00> : vector<8x128xf32>
    %224 = tpu.matmul %222, %180, %cst_50 {dimension_numbers = #tpu.dot_dimension_numbers<[1], [0], [0], [1], [0, 0, 1, 1], [], []>} : vector<8x32xf32>, vector<32x128xf32>, vector<8x128xf32> -> vector<8x128xf32>
    %225 = arith.addf %223, %224 : vector<8x128xf32>
    %226 = arith.negf %225 : vector<8x128xf32>
    %227 = math.exp %226 : vector<8x128xf32>
    %cst_51 = arith.constant 1.000000e+00 : f32
    %228 = vector.broadcast %cst_51 : f32 to vector<8x128xf32>
    %229 = arith.addf %228, %227 : vector<8x128xf32>
    %230 = arith.divf %228, %229 : vector<8x128xf32>
    %231 = math.tanh %225 : vector<8x128xf32>
    %232 = vector.extract_strided_slice %230 {offsets = [0, 0], sizes = [8, 32], strides = [1, 1]} : vector<8x128xf32> to vector<8x32xf32>
    %233 = vector.extract_strided_slice %230 {offsets = [0, 32], sizes = [8, 32], strides = [1, 1]} : vector<8x128xf32> to vector<8x32xf32>
    %234 = vector.extract_strided_slice %231 {offsets = [0, 64], sizes = [8, 32], strides = [1, 1]} : vector<8x128xf32> to vector<8x32xf32>
    %235 = vector.extract_strided_slice %230 {offsets = [0, 96], sizes = [8, 32], strides = [1, 1]} : vector<8x128xf32> to vector<8x32xf32>
    %236 = arith.mulf %233, %220 : vector<8x32xf32>
    %237 = arith.mulf %232, %234 : vector<8x32xf32>
    %238 = arith.addf %236, %237 : vector<8x32xf32>
    %239 = math.tanh %238 : vector<8x32xf32>
    %240 = arith.mulf %235, %239 : vector<8x32xf32>
    %241 = vector.extract_strided_slice %184 {offsets = [24, 0], sizes = [8, 128], strides = [1, 1]} : vector<64x128xf32> to vector<8x128xf32>
    %cst_52 = arith.constant dense<0.000000e+00> : vector<8x128xf32>
    %242 = tpu.matmul %240, %180, %cst_52 {dimension_numbers = #tpu.dot_dimension_numbers<[1], [0], [0], [1], [0, 0, 1, 1], [], []>} : vector<8x32xf32>, vector<32x128xf32>, vector<8x128xf32> -> vector<8x128xf32>
    %243 = arith.addf %241, %242 : vector<8x128xf32>
    %244 = arith.negf %243 : vector<8x128xf32>
    %245 = math.exp %244 : vector<8x128xf32>
    %cst_53 = arith.constant 1.000000e+00 : f32
    %246 = vector.broadcast %cst_53 : f32 to vector<8x128xf32>
    %247 = arith.addf %246, %245 : vector<8x128xf32>
    %248 = arith.divf %246, %247 : vector<8x128xf32>
    %249 = math.tanh %243 : vector<8x128xf32>
    %250 = vector.extract_strided_slice %248 {offsets = [0, 0], sizes = [8, 32], strides = [1, 1]} : vector<8x128xf32> to vector<8x32xf32>
    %251 = vector.extract_strided_slice %248 {offsets = [0, 32], sizes = [8, 32], strides = [1, 1]} : vector<8x128xf32> to vector<8x32xf32>
    %252 = vector.extract_strided_slice %249 {offsets = [0, 64], sizes = [8, 32], strides = [1, 1]} : vector<8x128xf32> to vector<8x32xf32>
    %253 = vector.extract_strided_slice %248 {offsets = [0, 96], sizes = [8, 32], strides = [1, 1]} : vector<8x128xf32> to vector<8x32xf32>
    %254 = arith.mulf %251, %238 : vector<8x32xf32>
    %255 = arith.mulf %250, %252 : vector<8x32xf32>
    %256 = arith.addf %254, %255 : vector<8x32xf32>
    %257 = math.tanh %256 : vector<8x32xf32>
    %258 = arith.mulf %253, %257 : vector<8x32xf32>
    %259 = vector.extract_strided_slice %184 {offsets = [32, 0], sizes = [8, 128], strides = [1, 1]} : vector<64x128xf32> to vector<8x128xf32>
    %cst_54 = arith.constant dense<0.000000e+00> : vector<8x128xf32>
    %260 = tpu.matmul %258, %180, %cst_54 {dimension_numbers = #tpu.dot_dimension_numbers<[1], [0], [0], [1], [0, 0, 1, 1], [], []>} : vector<8x32xf32>, vector<32x128xf32>, vector<8x128xf32> -> vector<8x128xf32>
    %261 = arith.addf %259, %260 : vector<8x128xf32>
    %262 = arith.negf %261 : vector<8x128xf32>
    %263 = math.exp %262 : vector<8x128xf32>
    %cst_55 = arith.constant 1.000000e+00 : f32
    %264 = vector.broadcast %cst_55 : f32 to vector<8x128xf32>
    %265 = arith.addf %264, %263 : vector<8x128xf32>
    %266 = arith.divf %264, %265 : vector<8x128xf32>
    %267 = math.tanh %261 : vector<8x128xf32>
    %268 = vector.extract_strided_slice %266 {offsets = [0, 0], sizes = [8, 32], strides = [1, 1]} : vector<8x128xf32> to vector<8x32xf32>
    %269 = vector.extract_strided_slice %266 {offsets = [0, 32], sizes = [8, 32], strides = [1, 1]} : vector<8x128xf32> to vector<8x32xf32>
    %270 = vector.extract_strided_slice %267 {offsets = [0, 64], sizes = [8, 32], strides = [1, 1]} : vector<8x128xf32> to vector<8x32xf32>
    %271 = vector.extract_strided_slice %266 {offsets = [0, 96], sizes = [8, 32], strides = [1, 1]} : vector<8x128xf32> to vector<8x32xf32>
    %272 = arith.mulf %269, %256 : vector<8x32xf32>
    %273 = arith.mulf %268, %270 : vector<8x32xf32>
    %274 = arith.addf %272, %273 : vector<8x32xf32>
    %275 = math.tanh %274 : vector<8x32xf32>
    %276 = arith.mulf %271, %275 : vector<8x32xf32>
    %277 = vector.extract_strided_slice %184 {offsets = [40, 0], sizes = [8, 128], strides = [1, 1]} : vector<64x128xf32> to vector<8x128xf32>
    %cst_56 = arith.constant dense<0.000000e+00> : vector<8x128xf32>
    %278 = tpu.matmul %276, %180, %cst_56 {dimension_numbers = #tpu.dot_dimension_numbers<[1], [0], [0], [1], [0, 0, 1, 1], [], []>} : vector<8x32xf32>, vector<32x128xf32>, vector<8x128xf32> -> vector<8x128xf32>
    %279 = arith.addf %277, %278 : vector<8x128xf32>
    %280 = arith.negf %279 : vector<8x128xf32>
    %281 = math.exp %280 : vector<8x128xf32>
    %cst_57 = arith.constant 1.000000e+00 : f32
    %282 = vector.broadcast %cst_57 : f32 to vector<8x128xf32>
    %283 = arith.addf %282, %281 : vector<8x128xf32>
    %284 = arith.divf %282, %283 : vector<8x128xf32>
    %285 = math.tanh %279 : vector<8x128xf32>
    %286 = vector.extract_strided_slice %284 {offsets = [0, 0], sizes = [8, 32], strides = [1, 1]} : vector<8x128xf32> to vector<8x32xf32>
    %287 = vector.extract_strided_slice %284 {offsets = [0, 32], sizes = [8, 32], strides = [1, 1]} : vector<8x128xf32> to vector<8x32xf32>
    %288 = vector.extract_strided_slice %285 {offsets = [0, 64], sizes = [8, 32], strides = [1, 1]} : vector<8x128xf32> to vector<8x32xf32>
    %289 = vector.extract_strided_slice %284 {offsets = [0, 96], sizes = [8, 32], strides = [1, 1]} : vector<8x128xf32> to vector<8x32xf32>
    %290 = arith.mulf %287, %274 : vector<8x32xf32>
    %291 = arith.mulf %286, %288 : vector<8x32xf32>
    %292 = arith.addf %290, %291 : vector<8x32xf32>
    %293 = math.tanh %292 : vector<8x32xf32>
    %294 = arith.mulf %289, %293 : vector<8x32xf32>
    %295 = vector.extract_strided_slice %184 {offsets = [48, 0], sizes = [8, 128], strides = [1, 1]} : vector<64x128xf32> to vector<8x128xf32>
    %cst_58 = arith.constant dense<0.000000e+00> : vector<8x128xf32>
    %296 = tpu.matmul %294, %180, %cst_58 {dimension_numbers = #tpu.dot_dimension_numbers<[1], [0], [0], [1], [0, 0, 1, 1], [], []>} : vector<8x32xf32>, vector<32x128xf32>, vector<8x128xf32> -> vector<8x128xf32>
    %297 = arith.addf %295, %296 : vector<8x128xf32>
    %298 = arith.negf %297 : vector<8x128xf32>
    %299 = math.exp %298 : vector<8x128xf32>
    %cst_59 = arith.constant 1.000000e+00 : f32
    %300 = vector.broadcast %cst_59 : f32 to vector<8x128xf32>
    %301 = arith.addf %300, %299 : vector<8x128xf32>
    %302 = arith.divf %300, %301 : vector<8x128xf32>
    %303 = math.tanh %297 : vector<8x128xf32>
    %304 = vector.extract_strided_slice %302 {offsets = [0, 0], sizes = [8, 32], strides = [1, 1]} : vector<8x128xf32> to vector<8x32xf32>
    %305 = vector.extract_strided_slice %302 {offsets = [0, 32], sizes = [8, 32], strides = [1, 1]} : vector<8x128xf32> to vector<8x32xf32>
    %306 = vector.extract_strided_slice %303 {offsets = [0, 64], sizes = [8, 32], strides = [1, 1]} : vector<8x128xf32> to vector<8x32xf32>
    %307 = vector.extract_strided_slice %302 {offsets = [0, 96], sizes = [8, 32], strides = [1, 1]} : vector<8x128xf32> to vector<8x32xf32>
    %308 = arith.mulf %305, %292 : vector<8x32xf32>
    %309 = arith.mulf %304, %306 : vector<8x32xf32>
    %310 = arith.addf %308, %309 : vector<8x32xf32>
    %311 = math.tanh %310 : vector<8x32xf32>
    %312 = arith.mulf %307, %311 : vector<8x32xf32>
    %313 = vector.extract_strided_slice %184 {offsets = [56, 0], sizes = [8, 128], strides = [1, 1]} : vector<64x128xf32> to vector<8x128xf32>
    %cst_60 = arith.constant dense<0.000000e+00> : vector<8x128xf32>
    %314 = tpu.matmul %312, %180, %cst_60 {dimension_numbers = #tpu.dot_dimension_numbers<[1], [0], [0], [1], [0, 0, 1, 1], [], []>} : vector<8x32xf32>, vector<32x128xf32>, vector<8x128xf32> -> vector<8x128xf32>
    %315 = arith.addf %313, %314 : vector<8x128xf32>
    %316 = arith.negf %315 : vector<8x128xf32>
    %317 = math.exp %316 : vector<8x128xf32>
    %cst_61 = arith.constant 1.000000e+00 : f32
    %318 = vector.broadcast %cst_61 : f32 to vector<8x128xf32>
    %319 = arith.addf %318, %317 : vector<8x128xf32>
    %320 = arith.divf %318, %319 : vector<8x128xf32>
    %321 = math.tanh %315 : vector<8x128xf32>
    %322 = vector.extract_strided_slice %320 {offsets = [0, 0], sizes = [8, 32], strides = [1, 1]} : vector<8x128xf32> to vector<8x32xf32>
    %323 = vector.extract_strided_slice %320 {offsets = [0, 32], sizes = [8, 32], strides = [1, 1]} : vector<8x128xf32> to vector<8x32xf32>
    %324 = vector.extract_strided_slice %321 {offsets = [0, 64], sizes = [8, 32], strides = [1, 1]} : vector<8x128xf32> to vector<8x32xf32>
    %325 = vector.extract_strided_slice %320 {offsets = [0, 96], sizes = [8, 32], strides = [1, 1]} : vector<8x128xf32> to vector<8x32xf32>
    %326 = arith.mulf %323, %310 : vector<8x32xf32>
    %327 = arith.mulf %322, %324 : vector<8x32xf32>
    %328 = arith.addf %326, %327 : vector<8x32xf32>
    %329 = math.tanh %328 : vector<8x32xf32>
    %330 = arith.mulf %325, %329 : vector<8x32xf32>
    %c0_62 = arith.constant 0 : index
    %c0_63 = arith.constant 0 : index
    %331 = vector.load %arg7[%c0_62, %c0_63] : memref<32x16xf32, #tpu.memory_space<vmem>>, vector<32x16xf32>
    %cst_64 = arith.constant dense<0.000000e+00> : vector<8x16xf32>
    %332 = tpu.matmul %330, %331, %cst_64 {dimension_numbers = #tpu.dot_dimension_numbers<[1], [0], [0], [1], [0, 0, 1, 1], [], []>} : vector<8x32xf32>, vector<32x16xf32>, vector<8x16xf32> -> vector<8x16xf32>
    %c0_65 = arith.constant 0 : index
    %c0_66 = arith.constant 0 : index
    %333 = vector.load %arg8[%c0_65, %c0_66] : memref<1x16xf32, #tpu.memory_space<vmem>>, vector<1x16xf32>
    %334 = vector.broadcast %333 : vector<1x16xf32> to vector<8x16xf32>
    %335 = arith.addf %332, %334 : vector<8x16xf32>
    %cst_67 = arith.constant 0.000000e+00 : f32
    %336 = vector.broadcast %cst_67 : f32 to vector<8x16xf32>
    %337 = arith.maximumf %335, %336 : vector<8x16xf32>
    %c0_68 = arith.constant 0 : index
    %c0_69 = arith.constant 0 : index
    %338 = vector.load %arg9[%c0_68, %c0_69] : memref<16x6xf32, #tpu.memory_space<vmem>>, vector<16x6xf32>
    %cst_70 = arith.constant dense<0.000000e+00> : vector<8x6xf32>
    %339 = tpu.matmul %337, %338, %cst_70 {dimension_numbers = #tpu.dot_dimension_numbers<[1], [0], [0], [1], [0, 0, 1, 1], [], []>} : vector<8x16xf32>, vector<16x6xf32>, vector<8x6xf32> -> vector<8x6xf32>
    %c0_71 = arith.constant 0 : index
    %c0_72 = arith.constant 0 : index
    %340 = vector.load %arg10[%c0_71, %c0_72] : memref<1x6xf32, #tpu.memory_space<vmem>>, vector<1x6xf32>
    %341 = vector.broadcast %340 : vector<1x6xf32> to vector<8x6xf32>
    %342 = arith.addf %339, %341 : vector<8x6xf32>
    %c0_73 = arith.constant 0 : index
    %c0_74 = arith.constant 0 : index
    %343 = vector.load %arg11[%c0_73, %c0_74] : memref<8x6xf32, #tpu.memory_space<vmem>>, vector<8x6xf32>
    tpu.vector_store %arg11[%c0_73, %c0_74], %342 {strides = array<i32>} : memref<8x6xf32, #tpu.memory_space<vmem>>, vector<8x6xf32>,
    return
  }
}

</mosaic_0001>

<llo_original>
// kernel: activity_classifier_forward.1
$region0: #{activity_classifier_forward.1}
  #allocation0 [shape = 'u32[]', space=smem, size = 0x4, offset = 0x4, fixed_abs, tag = 'smem constant byte address 0x4 - core index']
  #allocation1 [shape = 'u32[144,128]{1,0:T(1,128)}', space=vmem, size = 0x12000, scoped, tag = 'internal scratch']
  #allocation2 [shape = 'f32[64,32]{1,0:T(8,128)}', space=vmem, size = 0x8000, scoped, tag = 'scratch operand']
  %s0 = inlined_call_operand.vmem [shape: f32[8,8,4], index: 0, kind: input, shape index: {}]
  %s1 = inlined_call_operand.vmem [shape: f32[4,128], index: 1, kind: input, shape index: {}]
  %s2 = inlined_call_operand.vmem [shape: f32[32,128], index: 2, kind: input, shape index: {}]
  %s3 = inlined_call_operand.vmem [shape: f32[1,128], index: 3, kind: input, shape index: {}]
  %s4 = inlined_call_operand.vmem [shape: f32[32,128], index: 4, kind: input, shape index: {}]
  %s5 = inlined_call_operand.vmem [shape: f32[32,128], index: 5, kind: input, shape index: {}]
  %s6 = inlined_call_operand.vmem [shape: f32[1,128], index: 6, kind: input, shape index: {}]
  %s7 = inlined_call_operand.vmem [shape: f32[32,16], index: 7, kind: input, shape index: {}]
  %s8 = inlined_call_operand.vmem [shape: f32[1,16], index: 8, kind: input, shape index: {}]
  %s9 = inlined_call_operand.vmem [shape: f32[16,6], index: 9, kind: input, shape index: {}]
  %s10 = inlined_call_operand.vmem [shape: f32[1,6], index: 10, kind: input, shape index: {}]
  %s11 = inlined_call_operand.vmem [shape: f32[8,6], index: 11, kind: output, shape index: {}]
  %s12 = sld [smem:[#allocation0]]
  $region54: #{activity_classifier_forward.1} parent=0
    _
  %s14 = ssub.s32 1, %s12
  %s15 = scalar_select 0, %s14, %s12
  // Predicated region
  $region2: #{activity_classifier_forward.1} parent=0 // pred_check
    _
  $region3: #{activity_classifier_forward.1} parent=0 // pred_check_branch
    %17 = sbr.rel (0) target = $region5
  $region4: #{activity_classifier_forward.1} parent=0 // pred_region
    _
  $region5: #{activity_classifier_forward.1} parent=0 // pred_fallthru
    _
  // Predicated region
  $region6: #{activity_classifier_forward.1} parent=0 // pred_check
    _
  $region7: #{activity_classifier_forward.1} parent=0 // pred_check_branch
    %19 = sbr.rel (0) target = $region9
  $region8: #{activity_classifier_forward.1} parent=0 // pred_region
    _
  $region9: #{activity_classifier_forward.1} parent=0 // pred_fallthru
    _
  // Predicated region
  $region10: #{activity_classifier_forward.1} parent=0 // pred_check
    _
  $region11: #{activity_classifier_forward.1} parent=0 // pred_check_branch
    %21 = sbr.rel (0) target = $region13
  $region12: #{activity_classifier_forward.1} parent=0 // pred_region
    _
  $region13: #{activity_classifier_forward.1} parent=0 // pred_fallthru
    _
  // Predicated region
  $region14: #{activity_classifier_forward.1} parent=0 // pred_check
    _
  $region15: #{activity_classifier_forward.1} parent=0 // pred_check_branch
    %23 = sbr.rel (0) target = $region17
  $region16: #{activity_classifier_forward.1} parent=0 // pred_region
    _
  $region17: #{activity_classifier_forward.1} parent=0 // pred_fallthru
    _
  // Predicated region
  $region18: #{activity_classifier_forward.1} parent=0 // pred_check
    _
  $region19: #{activity_classifier_forward.1} parent=0 // pred_check_branch
    %25 = sbr.rel (0) target = $region21
  $region20: #{activity_classifier_forward.1} parent=0 // pred_region
    _
  $region21: #{activity_classifier_forward.1} parent=0 // pred_fallthru
    _
  // Predicated region
  $region22: #{activity_classifier_forward.1} parent=0 // pred_check
    _
  $region23: #{activity_classifier_forward.1} parent=0 // pred_check_branch
    %27 = sbr.rel (0) target = $region25
  $region24: #{activity_classifier_forward.1} parent=0 // pred_region
    _
  $region25: #{activity_classifier_forward.1} parent=0 // pred_fallthru
    _
  // Predicated region
  $region26: #{activity_classifier_forward.1} parent=0 // pred_check
    _
  $region27: #{activity_classifier_forward.1} parent=0 // pred_check_branch
    %29 = sbr.rel (0) target = $region29
  $region28: #{activity_classifier_forward.1} parent=0 // pred_region
    _
  $region29: #{activity_classifier_forward.1} parent=0 // pred_fallthru
    _
  // Predicated region
  $region30: #{activity_classifier_forward.1} parent=0 // pred_check
    _
  $region31: #{activity_classifier_forward.1} parent=0 // pred_check_branch
    %31 = sbr.rel (0) target = $region33
  $region32: #{activity_classifier_forward.1} parent=0 // pred_region
    _
  $region33: #{activity_classifier_forward.1} parent=0 // pred_fallthru
    _
  // Predicated region
  $region34: #{activity_classifier_forward.1} parent=0 // pred_check
    _
  $region35: #{activity_classifier_forward.1} parent=0 // pred_check_branch
    %33 = sbr.rel (0) target = $region37
  $region36: #{activity_classifier_forward.1} parent=0 // pred_region
    _
  $region37: #{activity_classifier_forward.1} parent=0 // pred_fallthru
    _
  // Predicated region
  $region38: #{activity_classifier_forward.1} parent=0 // pred_check
    _
  $region39: #{activity_classifier_forward.1} parent=0 // pred_check_branch
    %35 = sbr.rel (0) target = $region41
  $region40: #{activity_classifier_forward.1} parent=0 // pred_region
    _
  $region41: #{activity_classifier_forward.1} parent=0 // pred_fallthru
    _
  // Predicated region
  $region42: #{activity_classifier_forward.1} parent=0 // pred_check
    _
  $region43: #{activity_classifier_forward.1} parent=0 // pred_check_branch
    %37 = sbr.rel (0) target = $region45
  $region44: #{activity_classifier_forward.1} parent=0 // pred_region
    _
  $region45: #{activity_classifier_forward.1} parent=0 // pred_fallthru
    _
  %v38 = vld [vmem:[%s0] sm:$0xff]
  %v39 = vld [vmem:[%s0 + $0x8] sm:$0xff]
  %v40 = vld [vmem:[%s0 + $0x10] sm:$0xff]
  %v41 = vld [vmem:[%s0 + $0x18] sm:$0xff]
  %v42 = vld [vmem:[%s0 + $0x20] sm:$0xff]
  %v43 = vld [vmem:[%s0 + $0x28] sm:$0xff]
  %v44 = vld [vmem:[%s0 + $0x30] sm:$0xff]
  %v45 = vld [vmem:[%s0 + $0x38] sm:$0xff]
  %v54 = vrot.slane %v39, 7
  %vm55 = vcmask 1041409
  %v56 = vsel %vm55, %v54, %v38
  %v57 = vrot.slane %v40, 6
  %vm58 = vcmask 1042434
  %v59 = vsel %vm58, %v57, %v56
  %v60 = vrot.slane %v41, 5
  %vm61 = vcmask 1043459
  %v62 = vsel %vm61, %v60, %v59
  %v63 = vrot.slane %v42, 4
  %vm64 = vcmask 1044484
  %v65 = vsel %vm64, %v63, %v62
  %v66 = vrot.slane %v43, 3
  %vm67 = vcmask 1045509
  %v68 = vsel %vm67, %v66, %v65
  %v69 = vrot.slane %v44, 2
  %vm70 = vcmask 1046534
  %v71 = vsel %vm70, %v69, %v68
  %v72 = vrot.slane %v45, 1
  %vm73 = vcmask 1047559
  %v74 = vsel %vm73, %v72, %v71
  %v75 = vrot.slane %v38, 1
  %v76 = vsel %vm55, %v39, %v75
  %v77 = vrot.slane %v40, 7
  %v78 = vsel %vm58, %v77, %v76
  %v79 = vrot.slane %v41, 6
  %v80 = vsel %vm61, %v79, %v78
  %v81 = vrot.slane %v42, 5
  %v82 = vsel %vm64, %v81, %v80
  %v83 = vrot.slane %v43, 4
  %v84 = vsel %vm67, %v83, %v82
  %v85 = vrot.slane %v44, 3
  %v86 = vsel %vm70, %v85, %v84
  %v87 = vrot.slane %v45, 2
  %v88 = vsel %vm73, %v87, %v86
  %v89 = vrot.slane %v38, 2
  %v90 = vrot.slane %v39, 1
  %v91 = vsel %vm55, %v90, %v89
  %v92 = vsel %vm58, %v40, %v91
  %v93 = vrot.slane %v41, 7
  %v94 = vsel %vm61, %v93, %v92
  %v95 = vrot.slane %v42, 6
  %v96 = vsel %vm64, %v95, %v94
  %v97 = vrot.slane %v43, 5
  %v98 = vsel %vm67, %v97, %v96
  %v99 = vrot.slane %v44, 4
  %v100 = vsel %vm70, %v99, %v98
  %v101 = vrot.slane %v45, 3
  %v102 = vsel %vm73, %v101, %v100
  %v103 = vrot.slane %v38, 3
  %v104 = vrot.slane %v39, 2
  %v105 = vsel %vm55, %v104, %v103
  %v106 = vrot.slane %v40, 1
  %v107 = vsel %vm58, %v106, %v105
  %v108 = vsel %vm61, %v41, %v107
  %v109 = vrot.slane %v42, 7
  %v110 = vsel %vm64, %v109, %v108
  %v111 = vrot.slane %v43, 6
  %v112 = vsel %vm67, %v111, %v110
  %v113 = vrot.slane %v44, 5
  %v114 = vsel %vm70, %v113, %v112
  %v115 = vrot.slane %v45, 4
  %v116 = vsel %vm73, %v115, %v114
  %v117 = vrot.slane %v38, 4
  %v118 = vrot.slane %v39, 3
  %v119 = vsel %vm55, %v118, %v117
  %v120 = vrot.slane %v40, 2
  %v121 = vsel %vm58, %v120, %v119
  %v122 = vrot.slane %v41, 1
  %v123 = vsel %vm61, %v122, %v121
  %v124 = vsel %vm64, %v42, %v123
  %v125 = vrot.slane %v43, 7
  %v126 = vsel %vm67, %v125, %v124
  %v127 = vrot.slane %v44, 6
  %v128 = vsel %vm70, %v127, %v126
  %v129 = vrot.slane %v45, 5
  %v130 = vsel %vm73, %v129, %v128
  %v131 = vrot.slane %v38, 5
  %v132 = vrot.slane %v39, 4
  %v133 = vsel %vm55, %v132, %v131
  %v134 = vrot.slane %v40, 3
  %v135 = vsel %vm58, %v134, %v133
  %v136 = vrot.slane %v41, 2
  %v137 = vsel %vm61, %v136, %v135
  %v138 = vrot.slane %v42, 1
  %v139 = vsel %vm64, %v138, %v137
  %v140 = vsel %vm67, %v43, %v139
  %v141 = vrot.slane %v44, 7
  %v142 = vsel %vm70, %v141, %v140
  %v143 = vrot.slane %v45, 6
  %v144 = vsel %vm73, %v143, %v142
  %v145 = vrot.slane %v38, 6
  %v146 = vrot.slane %v39, 5
  %v147 = vsel %vm55, %v146, %v145
  %v148 = vrot.slane %v40, 4
  %v149 = vsel %vm58, %v148, %v147
  %v150 = vrot.slane %v41, 3
  %v151 = vsel %vm61, %v150, %v149
  %v152 = vrot.slane %v42, 2
  %v153 = vsel %vm64, %v152, %v151
  %v154 = vrot.slane %v43, 1
  %v155 = vsel %vm67, %v154, %v153
  %v156 = vsel %vm70, %v44, %v155
  %v157 = vrot.slane %v45, 7
  %v158 = vsel %vm73, %v157, %v156
  %v159 = vrot.slane %v38, 7
  %v160 = vrot.slane %v39, 6
  %v161 = vsel %vm55, %v160, %v159
  %v162 = vrot.slane %v40, 5
  %v163 = vsel %vm58, %v162, %v161
  %v164 = vrot.slane %v41, 4
  %v165 = vsel %vm61, %v164, %v163
  %v166 = vrot.slane %v42, 3
  %v167 = vsel %vm64, %v166, %v165
  %v168 = vrot.slane %v43, 2
  %v169 = vsel %vm67, %v168, %v167
  %v170 = vrot.slane %v44, 1
  %v171 = vsel %vm70, %v170, %v169
  %v172 = vsel %vm73, %v45, %v171
  %v173 = vld [vmem:[%s1] sm:$0xf]
  %v174 = vld [vmem:[%s2] sm:$0xff]
  %v175 = vld [vmem:[%s2 + $0x8] sm:$0xff]
  %v176 = vld [vmem:[%s2 + $0x10] sm:$0xff]
  %v177 = vld [vmem:[%s2 + $0x18] sm:$0xff]
  %v178 = vld [vmem:[%s3] sm:$0x1]
  %v180 = vlaneseq
  %v181 = vshrl.u32 %v180, 7
  %v182 = vsub.s32 0, %v181
  %v183 = vrot.slane %v178, %v182
  %vm185 = vcmask 31744
  %v186 = vsel %vm185, %v74, 0
  %v188 = vsel %vm185, %v88, 0
  %v190 = vsel %vm185, %v102, 0
  %v192 = vsel %vm185, %v116, 0
  %v194 = vsel %vm185, %v130, 0
  %v196 = vsel %vm185, %v144, 0
  %v198 = vsel %vm185, %v158, 0
  %v200 = vsel %vm185, %v172, 0
  %vm202 = vcmask 1043456
  %v204 = vsel %vm202, %v173, 0
  %206 = vmatprep.subr.mxu0 0.0
  %207 = vmatpush1.msra.mxu0 %v204
  %208 = vmatprep.subr.mxu0 0.0
  %209 = vmatpush1.msra.mxu0 0.0
  %210 = vmatprep.subr.mxu0 0.0
  %211 = vmatpush1.msra.mxu0 0.0
  %212 = vmatprep.subr.mxu0 0.0
  %213 = vmatpush1.msra.mxu0 0.0
  %214 = vmatprep.subr.mxu0 0.0
  %215 = vmatpush1.msra.mxu0 0.0
  %216 = vmatprep.subr.mxu0 0.0
  %217 = vmatpush1.msra.mxu0 0.0
  %218 = vmatprep.subr.mxu0 0.0
  %219 = vmatpush1.msra.mxu0 0.0
  %220 = vmatprep.subr.mxu0 0.0
  %221 = vmatpush1.msra.mxu0 0.0
  %222 = vmatprep.subr.mxu0 0.0
  %223 = vmatpush1.msra.mxu0 0.0
  %224 = vmatprep.subr.mxu0 0.0
  %225 = vmatpush1.msra.mxu0 0.0
  %226 = vmatprep.subr.mxu0 0.0
  %227 = vmatpush1.msra.mxu0 0.0
  %228 = vmatprep.subr.mxu0 0.0
  %229 = vmatpush1.msra.mxu0 0.0
  %230 = vmatprep.subr.mxu0 0.0
  %231 = vmatpush1.msra.mxu0 0.0
  %232 = vmatprep.subr.mxu0 0.0
  %233 = vmatpush1.msra.mxu0 0.0
  %234 = vmatprep.subr.mxu0 0.0
  %235 = vmatpush1.msra.mxu0 0.0
  %236 = vmatprep.subr.mxu0 0.0
  %237 = vmatpush1.msra.mxu0 0.0
  %238 = vmatprep.subr.mxu0 0.0
  %239 = vmatpush1.msra.mxu0 0.0
  %240 = vmatprep.subr.mxu0 0.0
  %241 = vmatpush1.msra.mxu0 0.0
  %242 = vmatprep.subr.mxu0 0.0
  %243 = vmatpush1.msra.mxu0 0.0
  %244 = vmatprep.subr.mxu0 0.0
  %245 = vmatpush1.msra.mxu0 0.0
  %246 = vmatprep.subr.mxu0 0.0
  %247 = vmatpush1.msra.mxu0 0.0
  %248 = vmatprep.subr.mxu0 0.0
  %249 = vmatpush1.msra.mxu0 0.0
  %250 = vmatprep.subr.mxu0 0.0
  %251 = vmatpush1.msra.mxu0 0.0
  %252 = vmatprep.subr.mxu0 0.0
  %253 = vmatpush1.msra.mxu0 0.0
  %254 = vmatprep.subr.mxu0 0.0
  %255 = vmatpush1.msra.mxu0 0.0
  %256 = vmatprep.subr.mxu0 0.0
  %257 = vmatpush1.msra.mxu0 0.0
  %258 = vmatprep.subr.mxu0 0.0
  %259 = vmatpush1.msra.mxu0 0.0
  %260 = vmatprep.subr.mxu0 0.0
  %261 = vmatpush1.msra.mxu0 0.0
  %262 = vmatprep.subr.mxu0 0.0
  %263 = vmatpush1.msra.mxu0 0.0
  %264 = vmatprep.subr.mxu0 0.0
  %265 = vmatpush1.msra.mxu0 0.0
  %266 = vmatprep.subr.mxu0 0.0
  %267 = vmatpush1.msra.mxu0 0.0
  %268 = vmatprep.subr.mxu0 0.0
  %269 = vmatpush1.msra.mxu0 0.0
  %270 = vmatprep.mubr.f32.mxu0 0.0
  %271 = vmatmul.mubr.f32.gmra.mrb[0].mxu0 %v186
  %v272 = vpop.f32.mrb[0].mxu0
  %v273 = vadd.f32 %v183, %v272
  %v274 = vpop.f32.mrb[0].mxu0
  %275 = vmatprep.mubr.f32.mxu0 0.0
  %276 = vmatmul.mubr.f32.gmra.mrb[0].mxu0 %v188
  %v277 = vpop.f32.mrb[0].mxu0
  %v278 = vadd.f32 %v183, %v277
  %v279 = vpop.f32.mrb[0].mxu0
  %280 = vmatprep.mubr.f32.mxu0 0.0
  %281 = vmatmul.mubr.f32.gmra.mrb[0].mxu0 %v190
  %v282 = vpop.f32.mrb[0].mxu0
  %v283 = vadd.f32 %v183, %v282
  %v284 = vpop.f32.mrb[0].mxu0
  %285 = vmatprep.mubr.f32.mxu0 0.0
  %286 = vmatmul.mubr.f32.gmra.mrb[0].mxu0 %v192
  %v287 = vpop.f32.mrb[0].mxu0
  %v288 = vadd.f32 %v183, %v287
  %v289 = vpop.f32.mrb[0].mxu0
  %290 = vmatprep.mubr.f32.mxu0 0.0
  %291 = vmatmul.mubr.f32.gmra.mrb[0].mxu0 %v194
  %v292 = vpop.f32.mrb[0].mxu0
  %v293 = vadd.f32 %v183, %v292
  %v294 = vpop.f32.mrb[0].mxu0
  %295 = vmatprep.mubr.f32.mxu0 0.0
  %296 = vmatmul.mubr.f32.gmra.mrb[0].mxu0 %v196
  %v297 = vpop.f32.mrb[0].mxu0
  %v298 = vadd.f32 %v183, %v297
  %v299 = vpop.f32.mrb[0].mxu0
  %300 = vmatprep.mubr.f32.mxu0 0.0
  %301 = vmatmul.mubr.f32.gmra.mrb[0].mxu0 %v198
  %v302 = vpop.f32.mrb[0].mxu0
  %v303 = vadd.f32 %v183, %v302
  %v304 = vpop.f32.mrb[0].mxu0
  %305 = vmatprep.mubr.f32.mxu0 0.0
  %306 = vmatmul.mubr.f32.gmra.mrb[0].mxu0 %v200
  %v307 = vpop.f32.mrb[0].mxu0
  %v308 = vadd.f32 %v183, %v307
  %v309 = vpop.f32.mrb[0].mxu0
  %310 = vdwg.mxu0
  %vm311 = vcmask 261120
  %v313 = vsel %vm311, 0.0, 0
  %315 = vmatprep.subr.mxu0 0.0
  %316 = vmatpush1.msra.mxu0 %v174
  %317 = vmatprep.subr.mxu0 0.0
  %318 = vmatpush1.msra.mxu0 %v175
  %319 = vmatprep.subr.mxu0 0.0
  %320 = vmatpush1.msra.mxu0 %v176
  %321 = vmatprep.subr.mxu0 0.0
  %322 = vmatpush1.msra.mxu0 %v177
  %323 = vmatprep.subr.mxu0 0.0
  %324 = vmatpush1.msra.mxu0 0.0
  %325 = vmatprep.subr.mxu0 0.0
  %326 = vmatpush1.msra.mxu0 0.0
  %327 = vmatprep.subr.mxu0 0.0
  %328 = vmatpush1.msra.mxu0 0.0
  %329 = vmatprep.subr.mxu0 0.0
  %330 = vmatpush1.msra.mxu0 0.0
  %331 = vmatprep.subr.mxu0 0.0
  %332 = vmatpush1.msra.mxu0 0.0
  %333 = vmatprep.subr.mxu0 0.0
  %334 = vmatpush1.msra.mxu0 0.0
  %335 = vmatprep.subr.mxu0 0.0
  %336 = vmatpush1.msra.mxu0 0.0
  %337 = vmatprep.subr.mxu0 0.0
  %338 = vmatpush1.msra.mxu0 0.0
  %339 = vmatprep.subr.mxu0 0.0
  %340 = vmatpush1.msra.mxu0 0.0
  %341 = vmatprep.subr.mxu0 0.0
  %342 = vmatpush1.msra.mxu0 0.0
  %343 = vmatprep.subr.mxu0 0.0
  %344 = vmatpush1.msra.mxu0 0.0
  %345 = vmatprep.subr.mxu0 0.0
  %346 = vmatpush1.msra.mxu0 0.0
  %347 = vmatprep.subr.mxu0 0.0
  %348 = vmatpush1.msra.mxu0 0.0
  %349 = vmatprep.subr.mxu0 0.0
  %350 = vmatpush1.msra.mxu0 0.0
  %351 = vmatprep.subr.mxu0 0.0
  %352 = vmatpush1.msra.mxu0 0.0
  %353 = vmatprep.subr.mxu0 0.0
  %354 = vmatpush1.msra.mxu0 0.0
  %355 = vmatprep.subr.mxu0 0.0
  %356 = vmatpush1.msra.mxu0 0.0
  %357 = vmatprep.subr.mxu0 0.0
  %358 = vmatpush1.msra.mxu0 0.0
  %359 = vmatprep.subr.mxu0 0.0
  %360 = vmatpush1.msra.mxu0 0.0
  %361 = vmatprep.subr.mxu0 0.0
  %362 = vmatpush1.msra.mxu0 0.0
  %363 = vmatprep.subr.mxu0 0.0
  %364 = vmatpush1.msra.mxu0 0.0
  %365 = vmatprep.subr.mxu0 0.0
  %366 = vmatpush1.msra.mxu0 0.0
  %367 = vmatprep.subr.mxu0 0.0
  %368 = vmatpush1.msra.mxu0 0.0
  %369 = vmatprep.subr.mxu0 0.0
  %370 = vmatpush1.msra.mxu0 0.0
  %371 = vmatprep.subr.mxu0 0.0
  %372 = vmatpush1.msra.mxu0 0.0
  %373 = vmatprep.subr.mxu0 0.0
  %374 = vmatpush1.msra.mxu0 0.0
  %375 = vmatprep.subr.mxu0 0.0
  %376 = vmatpush1.msra.mxu0 0.0
  %377 = vmatprep.subr.mxu0 0.0
  %378 = vmatpush1.msra.mxu0 0.0
  %379 = vmatprep.mubr.f32.mxu0 0.0
  %380 = vmatmul.mubr.f32.gmra.mrb[0].mxu0 %v313
  %v381 = vpop.f32.mrb[0].mxu0
  %v382 = vadd.f32 0.0, %v381
  %v383 = vpop.f32.mrb[0].mxu0
  %384 = vdwg.mxu0
  %v385 = vadd.f32 %v273, %v382
  %v386 = vxor.u32 %v385, 2147483648
  %v387 = vmul.f32 %v386, 1.442695
  %v388 = vpow.pop %v387
  %v389 = vadd.f32 %v388, 1.0
  %v390 = vrcp.pop %v389
  %v391 = vmul.f32 1.0, %v390
  %v392 = vtanh.pop %v385
  %v393 = vmul.f32 %v391, 0.0
  %395 = vrot.lane.b32.xlu0 %v392, 64
  %v396 = vpop.permute.xlu0 %395
  %v398 = vmul.f32 %v391, %v396
  %400 = vrot.lane.b32.xlu0 %v398, 32
  %v401 = vpop.permute.xlu0 %400
  %v403 = vadd.f32 %v393, %v401
  %v404 = vtanh.pop %v403
  %406 = vrot.lane.b32.xlu0 %v404, 64
  %v407 = vpop.permute.xlu0 %406
  %v409 = vmul.f32 %v391, %v407
  %411 = vrot.lane.b32.xlu0 %v409, 32
  %v412 = vpop.permute.xlu0 %411
  %414 = vst.msk [vmem:[#allocation2] sm:$0xff] %vm311, %v412
  %v415 = vsel %vm311, %v412, 0
  %417 = vmatprep.subr.mxu0 0.0
  %418 = vmatpush1.msra.mxu0 %v174
  %419 = vmatprep.subr.mxu0 0.0
  %420 = vmatpush1.msra.mxu0 %v175
  %421 = vmatprep.subr.mxu0 0.0
  %422 = vmatpush1.msra.mxu0 %v176
  %423 = vmatprep.subr.mxu0 0.0
  %424 = vmatpush1.msra.mxu0 %v177
  %425 = vmatprep.subr.mxu0 0.0
  %426 = vmatpush1.msra.mxu0 0.0
  %427 = vmatprep.subr.mxu0 0.0
  %428 = vmatpush1.msra.mxu0 0.0
  %429 = vmatprep.subr.mxu0 0.0
  %430 = vmatpush1.msra.mxu0 0.0
  %431 = vmatprep.subr.mxu0 0.0
  %432 = vmatpush1.msra.mxu0 0.0
  %433 = vmatprep.subr.mxu0 0.0
  %434 = vmatpush1.msra.mxu0 0.0
  %435 = vmatprep.subr.mxu0 0.0
  %436 = vmatpush1.msra.mxu0 0.0
  %437 = vmatprep.subr.mxu0 0.0
  %438 = vmatpush1.msra.mxu0 0.0
  %439 = vmatprep.subr.mxu0 0.0
  %440 = vmatpush1.msra.mxu0 0.0
  %441 = vmatprep.subr.mxu0 0.0
  %442 = vmatpush1.msra.mxu0 0.0
  %443 = vmatprep.subr.mxu0 0.0
  %444 = vmatpush1.msra.mxu0 0.0
  %445 = vmatprep.subr.mxu0 0.0
  %446 = vmatpush1.msra.mxu0 0.0
  %447 = vmatprep.subr.mxu0 0.0
  %448 = vmatpush1.msra.mxu0 0.0
  %449 = vmatprep.subr.mxu0 0.0
  %450 = vmatpush1.msra.mxu0 0.0
  %451 = vmatprep.subr.mxu0 0.0
  %452 = vmatpush1.msra.mxu0 0.0
  %453 = vmatprep.subr.mxu0 0.0
  %454 = vmatpush1.msra.mxu0 0.0
  %455 = vmatprep.subr.mxu0 0.0
  %456 = vmatpush1.msra.mxu0 0.0
  %457 = vmatprep.subr.mxu0 0.0
  %458 = vmatpush1.msra.mxu0 0.0
  %459 = vmatprep.subr.mxu0 0.0
  %460 = vmatpush1.msra.mxu0 0.0
  %461 = vmatprep.subr.mxu0 0.0
  %462 = vmatpush1.msra.mxu0 0.0
  %463 = vmatprep.subr.mxu0 0.0
  %464 = vmatpush1.msra.mxu0 0.0
  %465 = vmatprep.subr.mxu0 0.0
  %466 = vmatpush1.msra.mxu0 0.0
  %467 = vmatprep.subr.mxu0 0.0
  %468 = vmatpush1.msra.mxu0 0.0
  %469 = vmatprep.subr.mxu0 0.0
  %470 = vmatpush1.msra.mxu0 0.0
  %471 = vmatprep.subr.mxu0 0.0
  %472 = vmatpush1.msra.mxu0 0.0
  %473 = vmatprep.subr.mxu0 0.0
  %474 = vmatpush1.msra.mxu0 0.0
  %475 = vmatprep.subr.mxu0 0.0
  %476 = vmatpush1.msra.mxu0 0.0
  %477 = vmatprep.subr.mxu0 0.0
  %478 = vmatpush1.msra.mxu0 0.0
  %479 = vmatprep.subr.mxu0 0.0
  %480 = vmatpush1.msra.mxu0 0.0
  %481 = vmatprep.mubr.f32.mxu0 0.0
  %482 = vmatmul.mubr.f32.gmra.mrb[0].mxu0 %v415
  %v483 = vpop.f32.mrb[0].mxu0
  %v484 = vadd.f32 0.0, %v483
  %v485 = vpop.f32.mrb[0].mxu0
  %486 = vdwg.mxu0
  %v487 = vadd.f32 %v278, %v484
  %v488 = vxor.u32 %v487, 2147483648
  %v489 = vmul.f32 %v488, 1.442695
  %v490 = vpow.pop %v489
  %v491 = vadd.f32 %v490, 1.0
  %v492 = vrcp.pop %v491
  %v493 = vmul.f32 1.0, %v492
  %v494 = vtanh.pop %v487
  %v495 = vmul.f32 %v493, %v403
  %497 = vrot.lane.b32.xlu0 %v494, 64
  %v498 = vpop.permute.xlu0 %497
  %v500 = vmul.f32 %v493, %v498
  %502 = vrot.lane.b32.xlu0 %v500, 32
  %v503 = vpop.permute.xlu0 %502
  %v505 = vadd.f32 %v495, %v503
  %v506 = vtanh.pop %v505
  %508 = vrot.lane.b32.xlu0 %v506, 64
  %v509 = vpop.permute.xlu0 %508
  %v511 = vmul.f32 %v493, %v509
  %513 = vrot.lane.b32.xlu0 %v511, 32
  %v514 = vpop.permute.xlu0 %513
  %516 = vst.msk [vmem:[#allocation2 + $0x8] sm:$0xff] %vm311, %v514
  %v517 = vsel %vm311, %v514, 0
  %519 = vmatprep.subr.mxu0 0.0
  %520 = vmatpush1.msra.mxu0 %v174
  %521 = vmatprep.subr.mxu0 0.0
  %522 = vmatpush1.msra.mxu0 %v175
  %523 = vmatprep.subr.mxu0 0.0
  %524 = vmatpush1.msra.mxu0 %v176
  %525 = vmatprep.subr.mxu0 0.0
  %526 = vmatpush1.msra.mxu0 %v177
  %527 = vmatprep.subr.mxu0 0.0
  %528 = vmatpush1.msra.mxu0 0.0
  %529 = vmatprep.subr.mxu0 0.0
  %530 = vmatpush1.msra.mxu0 0.0
  %531 = vmatprep.subr.mxu0 0.0
  %532 = vmatpush1.msra.mxu0 0.0
  %533 = vmatprep.subr.mxu0 0.0
  %534 = vmatpush1.msra.mxu0 0.0
  %535 = vmatprep.subr.mxu0 0.0
  %536 = vmatpush1.msra.mxu0 0.0
  %537 = vmatprep.subr.mxu0 0.0
  %538 = vmatpush1.msra.mxu0 0.0
  %539 = vmatprep.subr.mxu0 0.0
  %540 = vmatpush1.msra.mxu0 0.0
  %541 = vmatprep.subr.mxu0 0.0
  %542 = vmatpush1.msra.mxu0 0.0
  %543 = vmatprep.subr.mxu0 0.0
  %544 = vmatpush1.msra.mxu0 0.0
  %545 = vmatprep.subr.mxu0 0.0
  %546 = vmatpush1.msra.mxu0 0.0
  %547 = vmatprep.subr.mxu0 0.0
  %548 = vmatpush1.msra.mxu0 0.0
  %549 = vmatprep.subr.mxu0 0.0
  %550 = vmatpush1.msra.mxu0 0.0
  %551 = vmatprep.subr.mxu0 0.0
  %552 = vmatpush1.msra.mxu0 0.0
  %553 = vmatprep.subr.mxu0 0.0
  %554 = vmatpush1.msra.mxu0 0.0
  %555 = vmatprep.subr.mxu0 0.0
  %556 = vmatpush1.msra.mxu0 0.0
  %557 = vmatprep.subr.mxu0 0.0
  %558 = vmatpush1.msra.mxu0 0.0
  %559 = vmatprep.subr.mxu0 0.0
  %560 = vmatpush1.msra.mxu0 0.0
  %561 = vmatprep.subr.mxu0 0.0
  %562 = vmatpush1.msra.mxu0 0.0
  %563 = vmatprep.subr.mxu0 0.0
  %564 = vmatpush1.msra.mxu0 0.0
  %565 = vmatprep.subr.mxu0 0.0
  %566 = vmatpush1.msra.mxu0 0.0
  %567 = vmatprep.subr.mxu0 0.0
  %568 = vmatpush1.msra.mxu0 0.0
  %569 = vmatprep.subr.mxu0 0.0
  %570 = vmatpush1.msra.mxu0 0.0
  %571 = vmatprep.subr.mxu0 0.0
  %572 = vmatpush1.msra.mxu0 0.0
  %573 = vmatprep.subr.mxu0 0.0
  %574 = vmatpush1.msra.mxu0 0.0
  %575 = vmatprep.subr.mxu0 0.0
  %576 = vmatpush1.msra.mxu0 0.0
  %577 = vmatprep.subr.mxu0 0.0
  %578 = vmatpush1.msra.mxu0 0.0
  %579 = vmatprep.subr.mxu0 0.0
  %580 = vmatpush1.msra.mxu0 0.0
  %581 = vmatprep.subr.mxu0 0.0
  %582 = vmatpush1.msra.mxu0 0.0
  %583 = vmatprep.mubr.f32.mxu0 0.0
  %584 = vmatmul.mubr.f32.gmra.mrb[0].mxu0 %v517
  %v585 = vpop.f32.mrb[0].mxu0
  %v586 = vadd.f32 0.0, %v585
  %v587 = vpop.f32.mrb[0].mxu0
  %588 = vdwg.mxu0
  %v589 = vadd.f32 %v283, %v586
  %v590 = vxor.u32 %v589, 2147483648
  %v591 = vmul.f32 %v590, 1.442695
  %v592 = vpow.pop %v591
  %v593 = vadd.f32 %v592, 1.0
  %v594 = vrcp.pop %v593
  %v595 = vmul.f32 1.0, %v594
  %v596 = vtanh.pop %v589
  %v597 = vmul.f32 %v595, %v505
  %599 = vrot.lane.b32.xlu0 %v596, 64
  %v600 = vpop.permute.xlu0 %599
  %v602 = vmul.f32 %v595, %v600
  %604 = vrot.lane.b32.xlu0 %v602, 32
  %v605 = vpop.permute.xlu0 %604
  %v607 = vadd.f32 %v597, %v605
  %v608 = vtanh.pop %v607
  %610 = vrot.lane.b32.xlu0 %v608, 64
  %v611 = vpop.permute.xlu0 %610
  %v613 = vmul.f32 %v595, %v611
  %615 = vrot.lane.b32.xlu0 %v613, 32
  %v616 = vpop.permute.xlu0 %615
  %618 = vst.msk [vmem:[#allocation2 + $0x10] sm:$0xff] %vm311, %v616
  %v619 = vsel %vm311, %v616, 0
  %621 = vmatprep.subr.mxu0 0.0
  %622 = vmatpush1.msra.mxu0 %v174
  %623 = vmatprep.subr.mxu0 0.0
  %624 = vmatpush1.msra.mxu0 %v175
  %625 = vmatprep.subr.mxu0 0.0
  %626 = vmatpush1.msra.mxu0 %v176
  %627 = vmatprep.subr.mxu0 0.0
  %628 = vmatpush1.msra.mxu0 %v177
  %629 = vmatprep.subr.mxu0 0.0
  %630 = vmatpush1.msra.mxu0 0.0
  %631 = vmatprep.subr.mxu0 0.0
  %632 = vmatpush1.msra.mxu0 0.0
  %633 = vmatprep.subr.mxu0 0.0
  %634 = vmatpush1.msra.mxu0 0.0
  %635 = vmatprep.subr.mxu0 0.0
  %636 = vmatpush1.msra.mxu0 0.0
  %637 = vmatprep.subr.mxu0 0.0
  %638 = vmatpush1.msra.mxu0 0.0
  %639 = vmatprep.subr.mxu0 0.0
  %640 = vmatpush1.msra.mxu0 0.0
  %641 = vmatprep.subr.mxu0 0.0
  %642 = vmatpush1.msra.mxu0 0.0
  %643 = vmatprep.subr.mxu0 0.0
  %644 = vmatpush1.msra.mxu0 0.0
  %645 = vmatprep.subr.mxu0 0.0
  %646 = vmatpush1.msra.mxu0 0.0
  %647 = vmatprep.subr.mxu0 0.0
  %648 = vmatpush1.msra.mxu0 0.0
  %649 = vmatprep.subr.mxu0 0.0
  %650 = vmatpush1.msra.mxu0 0.0
  %651 = vmatprep.subr.mxu0 0.0
  %652 = vmatpush1.msra.mxu0 0.0
  %653 = vmatprep.subr.mxu0 0.0
  %654 = vmatpush1.msra.mxu0 0.0
  %655 = vmatprep.subr.mxu0 0.0
  %656 = vmatpush1.msra.mxu0 0.0
  %657 = vmatprep.subr.mxu0 0.0
  %658 = vmatpush1.msra.mxu0 0.0
  %659 = vmatprep.subr.mxu0 0.0
  %660 = vmatpush1.msra.mxu0 0.0
  %661 = vmatprep.subr.mxu0 0.0
  %662 = vmatpush1.msra.mxu0 0.0
  %663 = vmatprep.subr.mxu0 0.0
  %664 = vmatpush1.msra.mxu0 0.0
  %665 = vmatprep.subr.mxu0 0.0
  %666 = vmatpush1.msra.mxu0 0.0
  %667 = vmatprep.subr.mxu0 0.0
  %668 = vmatpush1.msra.mxu0 0.0
  %669 = vmatprep.subr.mxu0 0.0
  %670 = vmatpush1.msra.mxu0 0.0
  %671 = vmatprep.subr.mxu0 0.0
  %672 = vmatpush1.msra.mxu0 0.0
  %673 = vmatprep.subr.mxu0 0.0
  %674 = vmatpush1.msra.mxu0 0.0
  %675 = vmatprep.subr.mxu0 0.0
  %676 = vmatpush1.msra.mxu0 0.0
  %677 = vmatprep.subr.mxu0 0.0
  %678 = vmatpush1.msra.mxu0 0.0
  %679 = vmatprep.subr.mxu0 0.0
  %680 = vmatpush1.msra.mxu0 0.0
  %681 = vmatprep.subr.mxu0 0.0
  %682 = vmatpush1.msra.mxu0 0.0
  %683 = vmatprep.subr.mxu0 0.0
  %684 = vmatpush1.msra.mxu0 0.0
  %685 = vmatprep.mubr.f32.mxu0 0.0
  %686 = vmatmul.mubr.f32.gmra.mrb[0].mxu0 %v619
  %v687 = vpop.f32.mrb[0].mxu0
  %v688 = vadd.f32 0.0, %v687
  %v689 = vpop.f32.mrb[0].mxu0
  %690 = vdwg.mxu0
  %v691 = vadd.f32 %v288, %v688
  %v692 = vxor.u32 %v691, 2147483648
  %v693 = vmul.f32 %v692, 1.442695
  %v694 = vpow.pop %v693
  %v695 = vadd.f32 %v694, 1.0
  %v696 = vrcp.pop %v695
  %v697 = vmul.f32 1.0, %v696
  %v698 = vtanh.pop %v691
  %v699 = vmul.f32 %v697, %v607
  %701 = vrot.lane.b32.xlu0 %v698, 64
  %v702 = vpop.permute.xlu0 %701
  %v704 = vmul.f32 %v697, %v702
  %706 = vrot.lane.b32.xlu0 %v704, 32
  %v707 = vpop.permute.xlu0 %706
  %v709 = vadd.f32 %v699, %v707
  %v710 = vtanh.pop %v709
  %712 = vrot.lane.b32.xlu0 %v710, 64
  %v713 = vpop.permute.xlu0 %712
  %v715 = vmul.f32 %v697, %v713
  %717 = vrot.lane.b32.xlu0 %v715, 32
  %v718 = vpop.permute.xlu0 %717
  %720 = vst.msk [vmem:[#allocation2 + $0x18] sm:$0xff] %vm311, %v718
  %v721 = vsel %vm311, %v718, 0
  %723 = vmatprep.subr.mxu0 0.0
  %724 = vmatpush1.msra.mxu0 %v174
  %725 = vmatprep.subr.mxu0 0.0
  %726 = vmatpush1.msra.mxu0 %v175
  %727 = vmatprep.subr.mxu0 0.0
  %728 = vmatpush1.msra.mxu0 %v176
  %729 = vmatprep.subr.mxu0 0.0
  %730 = vmatpush1.msra.mxu0 %v177
  %731 = vmatprep.subr.mxu0 0.0
  %732 = vmatpush1.msra.mxu0 0.0
  %733 = vmatprep.subr.mxu0 0.0
  %734 = vmatpush1.msra.mxu0 0.0
  %735 = vmatprep.subr.mxu0 0.0
  %736 = vmatpush1.msra.mxu0 0.0
  %737 = vmatprep.subr.mxu0 0.0
  %738 = vmatpush1.msra.mxu0 0.0
  %739 = vmatprep.subr.mxu0 0.0
  %740 = vmatpush1.msra.mxu0 0.0
  %741 = vmatprep.subr.mxu0 0.0
  %742 = vmatpush1.msra.mxu0 0.0
  %743 = vmatprep.subr.mxu0 0.0
  %744 = vmatpush1.msra.mxu0 0.0
  %745 = vmatprep.subr.mxu0 0.0
  %746 = vmatpush1.msra.mxu0 0.0
  %747 = vmatprep.subr.mxu0 0.0
  %748 = vmatpush1.msra.mxu0 0.0
  %749 = vmatprep.subr.mxu0 0.0
  %750 = vmatpush1.msra.mxu0 0.0
  %751 = vmatprep.subr.mxu0 0.0
  %752 = vmatpush1.msra.mxu0 0.0
  %753 = vmatprep.subr.mxu0 0.0
  %754 = vmatpush1.msra.mxu0 0.0
  %755 = vmatprep.subr.mxu0 0.0
  %756 = vmatpush1.msra.mxu0 0.0
  %757 = vmatprep.subr.mxu0 0.0
  %758 = vmatpush1.msra.mxu0 0.0
  %759 = vmatprep.subr.mxu0 0.0
  %760 = vmatpush1.msra.mxu0 0.0
  %761 = vmatprep.subr.mxu0 0.0
  %762 = vmatpush1.msra.mxu0 0.0
  %763 = vmatprep.subr.mxu0 0.0
  %764 = vmatpush1.msra.mxu0 0.0
  %765 = vmatprep.subr.mxu0 0.0
  %766 = vmatpush1.msra.mxu0 0.0
  %767 = vmatprep.subr.mxu0 0.0
  %768 = vmatpush1.msra.mxu0 0.0
  %769 = vmatprep.subr.mxu0 0.0
  %770 = vmatpush1.msra.mxu0 0.0
  %771 = vmatprep.subr.mxu0 0.0
  %772 = vmatpush1.msra.mxu0 0.0
  %773 = vmatprep.subr.mxu0 0.0
  %774 = vmatpush1.msra.mxu0 0.0
  %775 = vmatprep.subr.mxu0 0.0
  %776 = vmatpush1.msra.mxu0 0.0
  %777 = vmatprep.subr.mxu0 0.0
  %778 = vmatpush1.msra.mxu0 0.0
  %779 = vmatprep.subr.mxu0 0.0
  %780 = vmatpush1.msra.mxu0 0.0
  %781 = vmatprep.subr.mxu0 0.0
  %782 = vmatpush1.msra.mxu0 0.0
  %783 = vmatprep.subr.mxu0 0.0
  %784 = vmatpush1.msra.mxu0 0.0
  %785 = vmatprep.subr.mxu0 0.0
  %786 = vmatpush1.msra.mxu0 0.0
  %787 = vmatprep.mubr.f32.mxu0 0.0
  %788 = vmatmul.mubr.f32.gmra.mrb[0].mxu0 %v721
  %v789 = vpop.f32.mrb[0].mxu0
  %v790 = vadd.f32 0.0, %v789
  %v791 = vpop.f32.mrb[0].mxu0
  %792 = vdwg.mxu0
  %v793 = vadd.f32 %v293, %v790
  %v794 = vxor.u32 %v793, 2147483648
  %v795 = vmul.f32 %v794, 1.442695
  %v796 = vpow.pop %v795
  %v797 = vadd.f32 %v796, 1.0
  %v798 = vrcp.pop %v797
  %v799 = vmul.f32 1.0, %v798
  %v800 = vtanh.pop %v793
  %v801 = vmul.f32 %v799, %v709
  %803 = vrot.lane.b32.xlu0 %v800, 64
  %v804 = vpop.permute.xlu0 %803
  %v806 = vmul.f32 %v799, %v804
  %808 = vrot.lane.b32.xlu0 %v806, 32
  %v809 = vpop.permute.xlu0 %808
  %v811 = vadd.f32 %v801, %v809
  %v812 = vtanh.pop %v811
  %814 = vrot.lane.b32.xlu0 %v812, 64
  %v815 = vpop.permute.xlu0 %814
  %v817 = vmul.f32 %v799, %v815
  %819 = vrot.lane.b32.xlu0 %v817, 32
  %v820 = vpop.permute.xlu0 %819
  %822 = vst.msk [vmem:[#allocation2 + $0x20] sm:$0xff] %vm311, %v820
  %v823 = vsel %vm311, %v820, 0
  %825 = vmatprep.subr.mxu0 0.0
  %826 = vmatpush1.msra.mxu0 %v174
  %827 = vmatprep.subr.mxu0 0.0
  %828 = vmatpush1.msra.mxu0 %v175
  %829 = vmatprep.subr.mxu0 0.0
  %830 = vmatpush1.msra.mxu0 %v176
  %831 = vmatprep.subr.mxu0 0.0
  %832 = vmatpush1.msra.mxu0 %v177
  %833 = vmatprep.subr.mxu0 0.0
  %834 = vmatpush1.msra.mxu0 0.0
  %835 = vmatprep.subr.mxu0 0.0
  %836 = vmatpush1.msra.mxu0 0.0
  %837 = vmatprep.subr.mxu0 0.0
  %838 = vmatpush1.msra.mxu0 0.0
  %839 = vmatprep.subr.mxu0 0.0
  %840 = vmatpush1.msra.mxu0 0.0
  %841 = vmatprep.subr.mxu0 0.0
  %842 = vmatpush1.msra.mxu0 0.0
  %843 = vmatprep.subr.mxu0 0.0
  %844 = vmatpush1.msra.mxu0 0.0
  %845 = vmatprep.subr.mxu0 0.0
  %846 = vmatpush1.msra.mxu0 0.0
  %847 = vmatprep.subr.mxu0 0.0
  %848 = vmatpush1.msra.mxu0 0.0
  %849 = vmatprep.subr.mxu0 0.0
  %850 = vmatpush1.msra.mxu0 0.0
  %851 = vmatprep.subr.mxu0 0.0
  %852 = vmatpush1.msra.mxu0 0.0
  %853 = vmatprep.subr.mxu0 0.0
  %854 = vmatpush1.msra.mxu0 0.0
  %855 = vmatprep.subr.mxu0 0.0
  %856 = vmatpush1.msra.mxu0 0.0
  %857 = vmatprep.subr.mxu0 0.0
  %858 = vmatpush1.msra.mxu0 0.0
  %859 = vmatprep.subr.mxu0 0.0
  %860 = vmatpush1.msra.mxu0 0.0
  %861 = vmatprep.subr.mxu0 0.0
  %862 = vmatpush1.msra.mxu0 0.0
  %863 = vmatprep.subr.mxu0 0.0
  %864 = vmatpush1.msra.mxu0 0.0
  %865 = vmatprep.subr.mxu0 0.0
  %866 = vmatpush1.msra.mxu0 0.0
  %867 = vmatprep.subr.mxu0 0.0
  %868 = vmatpush1.msra.mxu0 0.0
  %869 = vmatprep.subr.mxu0 0.0
  %870 = vmatpush1.msra.mxu0 0.0
  %871 = vmatprep.subr.mxu0 0.0
  %872 = vmatpush1.msra.mxu0 0.0
  %873 = vmatprep.subr.mxu0 0.0
  %874 = vmatpush1.msra.mxu0 0.0
  %875 = vmatprep.subr.mxu0 0.0
  %876 = vmatpush1.msra.mxu0 0.0
  %877 = vmatprep.subr.mxu0 0.0
  %878 = vmatpush1.msra.mxu0 0.0
  %879 = vmatprep.subr.mxu0 0.0
  %880 = vmatpush1.msra.mxu0 0.0
  %881 = vmatprep.subr.mxu0 0.0
  %882 = vmatpush1.msra.mxu0 0.0
  %883 = vmatprep.subr.mxu0 0.0
  %884 = vmatpush1.msra.mxu0 0.0
  %885 = vmatprep.subr.mxu0 0.0
  %886 = vmatpush1.msra.mxu0 0.0
  %887 = vmatprep.subr.mxu0 0.0
  %888 = vmatpush1.msra.mxu0 0.0
  %889 = vmatprep.mubr.f32.mxu0 0.0
  %890 = vmatmul.mubr.f32.gmra.mrb[0].mxu0 %v823
  %v891 = vpop.f32.mrb[0].mxu0
  %v892 = vadd.f32 0.0, %v891
  %v893 = vpop.f32.mrb[0].mxu0
  %894 = vdwg.mxu0
  %v895 = vadd.f32 %v298, %v892
  %v896 = vxor.u32 %v895, 2147483648
  %v897 = vmul.f32 %v896, 1.442695
  %v898 = vpow.pop %v897
  %v899 = vadd.f32 %v898, 1.0
  %v900 = vrcp.pop %v899
  %v901 = vmul.f32 1.0, %v900
  %v902 = vtanh.pop %v895
  %v903 = vmul.f32 %v901, %v811
  %905 = vrot.lane.b32.xlu0 %v902, 64
  %v906 = vpop.permute.xlu0 %905
  %v908 = vmul.f32 %v901, %v906
  %910 = vrot.lane.b32.xlu0 %v908, 32
  %v911 = vpop.permute.xlu0 %910
  %v913 = vadd.f32 %v903, %v911
  %v914 = vtanh.pop %v913
  %916 = vrot.lane.b32.xlu0 %v914, 64
  %v917 = vpop.permute.xlu0 %916
  %v919 = vmul.f32 %v901, %v917
  %921 = vrot.lane.b32.xlu0 %v919, 32
  %v922 = vpop.permute.xlu0 %921
  %924 = vst.msk [vmem:[#allocation2 + $0x28] sm:$0xff] %vm311, %v922
  %v925 = vsel %vm311, %v922, 0
  %927 = vmatprep.subr.mxu0 0.0
  %928 = vmatpush1.msra.mxu0 %v174
  %929 = vmatprep.subr.mxu0 0.0
  %930 = vmatpush1.msra.mxu0 %v175
  %931 = vmatprep.subr.mxu0 0.0
  %932 = vmatpush1.msra.mxu0 %v176
  %933 = vmatprep.subr.mxu0 0.0
  %934 = vmatpush1.msra.mxu0 %v177
  %935 = vmatprep.subr.mxu0 0.0
  %936 = vmatpush1.msra.mxu0 0.0
  %937 = vmatprep.subr.mxu0 0.0
  %938 = vmatpush1.msra.mxu0 0.0
  %939 = vmatprep.subr.mxu0 0.0
  %940 = vmatpush1.msra.mxu0 0.0
  %941 = vmatprep.subr.mxu0 0.0
  %942 = vmatpush1.msra.mxu0 0.0
  %943 = vmatprep.subr.mxu0 0.0
  %944 = vmatpush1.msra.mxu0 0.0
  %945 = vmatprep.subr.mxu0 0.0
  %946 = vmatpush1.msra.mxu0 0.0
  %947 = vmatprep.subr.mxu0 0.0
  %948 = vmatpush1.msra.mxu0 0.0
  %949 = vmatprep.subr.mxu0 0.0
  %950 = vmatpush1.msra.mxu0 0.0
  %951 = vmatprep.subr.mxu0 0.0
  %952 = vmatpush1.msra.mxu0 0.0
  %953 = vmatprep.subr.mxu0 0.0
  %954 = vmatpush1.msra.mxu0 0.0
  %955 = vmatprep.subr.mxu0 0.0
  %956 = vmatpush1.msra.mxu0 0.0
  %957 = vmatprep.subr.mxu0 0.0
  %958 = vmatpush1.msra.mxu0 0.0
  %959 = vmatprep.subr.mxu0 0.0
  %960 = vmatpush1.msra.mxu0 0.0
  %961 = vmatprep.subr.mxu0 0.0
  %962 = vmatpush1.msra.mxu0 0.0
  %963 = vmatprep.subr.mxu0 0.0
  %964 = vmatpush1.msra.mxu0 0.0
  %965 = vmatprep.subr.mxu0 0.0
  %966 = vmatpush1.msra.mxu0 0.0
  %967 = vmatprep.subr.mxu0 0.0
  %968 = vmatpush1.msra.mxu0 0.0
  %969 = vmatprep.subr.mxu0 0.0
  %970 = vmatpush1.msra.mxu0 0.0
  %971 = vmatprep.subr.mxu0 0.0
  %972 = vmatpush1.msra.mxu0 0.0
  %973 = vmatprep.subr.mxu0 0.0
  %974 = vmatpush1.msra.mxu0 0.0
  %975 = vmatprep.subr.mxu0 0.0
  %976 = vmatpush1.msra.mxu0 0.0
  %977 = vmatprep.subr.mxu0 0.0
  %978 = vmatpush1.msra.mxu0 0.0
  %979 = vmatprep.subr.mxu0 0.0
  %980 = vmatpush1.msra.mxu0 0.0
  %981 = vmatprep.subr.mxu0 0.0
  %982 = vmatpush1.msra.mxu0 0.0
  %983 = vmatprep.subr.mxu0 0.0
  %984 = vmatpush1.msra.mxu0 0.0
  %985 = vmatprep.subr.mxu0 0.0
  %986 = vmatpush1.msra.mxu0 0.0
  %987 = vmatprep.subr.mxu0 0.0
  %988 = vmatpush1.msra.mxu0 0.0
  %989 = vmatprep.subr.mxu0 0.0
  %990 = vmatpush1.msra.mxu0 0.0
  %991 = vmatprep.mubr.f32.mxu0 0.0
  %992 = vmatmul.mubr.f32.gmra.mrb[0].mxu0 %v925
  %v993 = vpop.f32.mrb[0].mxu0
  %v994 = vadd.f32 0.0, %v993
  %v995 = vpop.f32.mrb[0].mxu0
  %996 = vdwg.mxu0
  %v997 = vadd.f32 %v303, %v994
  %v998 = vxor.u32 %v997, 2147483648
  %v999 = vmul.f32 %v998, 1.442695
  %v1000 = vpow.pop %v999
  %v1001 = vadd.f32 %v1000, 1.0
  %v1002 = vrcp.pop %v1001
  %v1003 = vmul.f32 1.0, %v1002
  %v1004 = vtanh.pop %v997
  %v1005 = vmul.f32 %v1003, %v913
  %1007 = vrot.lane.b32.xlu0 %v1004, 64
  %v1008 = vpop.permute.xlu0 %1007
  %v1010 = vmul.f32 %v1003, %v1008
  %1012 = vrot.lane.b32.xlu0 %v1010, 32
  %v1013 = vpop.permute.xlu0 %1012
  %v1015 = vadd.f32 %v1005, %v1013
  %v1016 = vtanh.pop %v1015
  %1018 = vrot.lane.b32.xlu0 %v1016, 64
  %v1019 = vpop.permute.xlu0 %1018
  %v1021 = vmul.f32 %v1003, %v1019
  %1023 = vrot.lane.b32.xlu0 %v1021, 32
  %v1024 = vpop.permute.xlu0 %1023
  %1026 = vst.msk [vmem:[#allocation2 + $0x30] sm:$0xff] %vm311, %v1024
  %v1027 = vsel %vm311, %v1024, 0
  %1029 = vmatprep.subr.mxu0 0.0
  %1030 = vmatpush1.msra.mxu0 %v174
  %1031 = vmatprep.subr.mxu0 0.0
  %1032 = vmatpush1.msra.mxu0 %v175
  %1033 = vmatprep.subr.mxu0 0.0
  %1034 = vmatpush1.msra.mxu0 %v176
  %1035 = vmatprep.subr.mxu0 0.0
  %1036 = vmatpush1.msra.mxu0 %v177
  %1037 = vmatprep.subr.mxu0 0.0
  %1038 = vmatpush1.msra.mxu0 0.0
  %1039 = vmatprep.subr.mxu0 0.0
  %1040 = vmatpush1.msra.mxu0 0.0
  %1041 = vmatprep.subr.mxu0 0.0
  %1042 = vmatpush1.msra.mxu0 0.0
  %1043 = vmatprep.subr.mxu0 0.0
  %1044 = vmatpush1.msra.mxu0 0.0
  %1045 = vmatprep.subr.mxu0 0.0
  %1046 = vmatpush1.msra.mxu0 0.0
  %1047 = vmatprep.subr.mxu0 0.0
  %1048 = vmatpush1.msra.mxu0 0.0
  %1049 = vmatprep.subr.mxu0 0.0
  %1050 = vmatpush1.msra.mxu0 0.0
  %1051 = vmatprep.subr.mxu0 0.0
  %1052 = vmatpush1.msra.mxu0 0.0
  %1053 = vmatprep.subr.mxu0 0.0
  %1054 = vmatpush1.msra.mxu0 0.0
  %1055 = vmatprep.subr.mxu0 0.0
  %1056 = vmatpush1.msra.mxu0 0.0
  %1057 = vmatprep.subr.mxu0 0.0
  %1058 = vmatpush1.msra.mxu0 0.0
  %1059 = vmatprep.subr.mxu0 0.0
  %1060 = vmatpush1.msra.mxu0 0.0
  %1061 = vmatprep.subr.mxu0 0.0
  %1062 = vmatpush1.msra.mxu0 0.0
  %1063 = vmatprep.subr.mxu0 0.0
  %1064 = vmatpush1.msra.mxu0 0.0
  %1065 = vmatprep.subr.mxu0 0.0
  %1066 = vmatpush1.msra.mxu0 0.0
  %1067 = vmatprep.subr.mxu0 0.0
  %1068 = vmatpush1.msra.mxu0 0.0
  %1069 = vmatprep.subr.mxu0 0.0
  %1070 = vmatpush1.msra.mxu0 0.0
  %1071 = vmatprep.subr.mxu0 0.0
  %1072 = vmatpush1.msra.mxu0 0.0
  %1073 = vmatprep.subr.mxu0 0.0
  %1074 = vmatpush1.msra.mxu0 0.0
  %1075 = vmatprep.subr.mxu0 0.0
  %1076 = vmatpush1.msra.mxu0 0.0
  %1077 = vmatprep.subr.mxu0 0.0
  %1078 = vmatpush1.msra.mxu0 0.0
  %1079 = vmatprep.subr.mxu0 0.0
  %1080 = vmatpush1.msra.mxu0 0.0
  %1081 = vmatprep.subr.mxu0 0.0
  %1082 = vmatpush1.msra.mxu0 0.0
  %1083 = vmatprep.subr.mxu0 0.0
  %1084 = vmatpush1.msra.mxu0 0.0
  %1085 = vmatprep.subr.mxu0 0.0
  %1086 = vmatpush1.msra.mxu0 0.0
  %1087 = vmatprep.subr.mxu0 0.0
  %1088 = vmatpush1.msra.mxu0 0.0
  %1089 = vmatprep.subr.mxu0 0.0
  %1090 = vmatpush1.msra.mxu0 0.0
  %1091 = vmatprep.subr.mxu0 0.0
  %1092 = vmatpush1.msra.mxu0 0.0
  %1093 = vmatprep.mubr.f32.mxu0 0.0
  %1094 = vmatmul.mubr.f32.gmra.mrb[0].mxu0 %v1027
  %v1095 = vpop.f32.mrb[0].mxu0
  %v1096 = vadd.f32 0.0, %v1095
  %v1097 = vpop.f32.mrb[0].mxu0
  %1098 = vdwg.mxu0
  %v1099 = vadd.f32 %v308, %v1096
  %v1100 = vxor.u32 %v1099, 2147483648
  %v1101 = vmul.f32 %v1100, 1.442695
  %v1102 = vpow.pop %v1101
  %v1103 = vadd.f32 %v1102, 1.0
  %v1104 = vrcp.pop %v1103
  %v1105 = vmul.f32 1.0, %v1104
  %v1106 = vtanh.pop %v1099
  %v1107 = vmul.f32 %v1105, %v1015
  %1109 = vrot.lane.b32.xlu0 %v1106, 64
  %v1110 = vpop.permute.xlu0 %1109
  %v1112 = vmul.f32 %v1105, %v1110
  %1114 = vrot.lane.b32.xlu0 %v1112, 32
  %v1115 = vpop.permute.xlu0 %1114
  %v1117 = vadd.f32 %v1107, %v1115
  %v1118 = vtanh.pop %v1117
  %1120 = vrot.lane.b32.xlu0 %v1118, 64
  %v1121 = vpop.permute.xlu0 %1120
  %v1123 = vmul.f32 %v1105, %v1121
  %1125 = vrot.lane.b32.xlu0 %v1123, 32
  %v1126 = vpop.permute.xlu0 %1125
  %1128 = vst.msk [vmem:[#allocation2 + $0x38] sm:$0xff] %vm311, %v1126
  %v1129 = vld [vmem:[#allocation2] sm:$0xff]
  %v1130 = vld [vmem:[#allocation2 + $0x8] sm:$0xff]
  %v1131 = vld [vmem:[#allocation2 + $0x10] sm:$0xff]
  %v1132 = vld [vmem:[#allocation2 + $0x18] sm:$0xff]
  %v1133 = vld [vmem:[#allocation2 + $0x20] sm:$0xff]
  %v1134 = vld [vmem:[#allocation2 + $0x28] sm:$0xff]
  %v1135 = vld [vmem:[#allocation2 + $0x30] sm:$0xff]
  %v1136 = vld [vmem:[#allocation2 + $0x38] sm:$0xff]
  %v1137 = vld [vmem:[%s4] sm:$0xff]
  %v1138 = vld [vmem:[%s4 + $0x8] sm:$0xff]
  %v1139 = vld [vmem:[%s4 + $0x10] sm:$0xff]
  %v1140 = vld [vmem:[%s4 + $0x18] sm:$0xff]
  %v1141 = vld [vmem:[%s5] sm:$0xff]
  %v1142 = vld [vmem:[%s5 + $0x8] sm:$0xff]
  %v1143 = vld [vmem:[%s5 + $0x10] sm:$0xff]
  %v1144 = vld [vmem:[%s5 + $0x18] sm:$0xff]
  %v1145 = vld [vmem:[%s6] sm:$0x1]
  %v1147 = vlaneseq
  %v1148 = vshrl.u32 %v1147, 7
  %v1149 = vsub.s32 0, %v1148
  %v1150 = vrot.slane %v1145, %v1149
  %v1153 = vsel %vm311, %v1129, 0
  %v1156 = vsel %vm311, %v1130, 0
  %v1159 = vsel %vm311, %v1131, 0
  %v1162 = vsel %vm311, %v1132, 0
  %v1165 = vsel %vm311, %v1133, 0
  %v1168 = vsel %vm311, %v1134, 0
  %v1171 = vsel %vm311, %v1135, 0
  %v1174 = vsel %vm311, %v1136, 0
  %1176 = vmatprep.subr.mxu0 0.0
  %1177 = vmatpush1.msra.mxu0 %v1137
  %1178 = vmatprep.subr.mxu0 0.0
  %1179 = vmatpush1.msra.mxu0 %v1138
  %1180 = vmatprep.subr.mxu0 0.0
  %1181 = vmatpush1.msra.mxu0 %v1139
  %1182 = vmatprep.subr.mxu0 0.0
  %1183 = vmatpush1.msra.mxu0 %v1140
  %1184 = vmatprep.subr.mxu0 0.0
  %1185 = vmatpush1.msra.mxu0 0.0
  %1186 = vmatprep.subr.mxu0 0.0
  %1187 = vmatpush1.msra.mxu0 0.0
  %1188 = vmatprep.subr.mxu0 0.0
  %1189 = vmatpush1.msra.mxu0 0.0
  %1190 = vmatprep.subr.mxu0 0.0
  %1191 = vmatpush1.msra.mxu0 0.0
  %1192 = vmatprep.subr.mxu0 0.0
  %1193 = vmatpush1.msra.mxu0 0.0
  %1194 = vmatprep.subr.mxu0 0.0
  %1195 = vmatpush1.msra.mxu0 0.0
  %1196 = vmatprep.subr.mxu0 0.0
  %1197 = vmatpush1.msra.mxu0 0.0
  %1198 = vmatprep.subr.mxu0 0.0
  %1199 = vmatpush1.msra.mxu0 0.0
  %1200 = vmatprep.subr.mxu0 0.0
  %1201 = vmatpush1.msra.mxu0 0.0
  %1202 = vmatprep.subr.mxu0 0.0
  %1203 = vmatpush1.msra.mxu0 0.0
  %1204 = vmatprep.subr.mxu0 0.0
  %1205 = vmatpush1.msra.mxu0 0.0
  %1206 = vmatprep.subr.mxu0 0.0
  %1207 = vmatpush1.msra.mxu0 0.0
  %1208 = vmatprep.subr.mxu0 0.0
  %1209 = vmatpush1.msra.mxu0 0.0
  %1210 = vmatprep.subr.mxu0 0.0
  %1211 = vmatpush1.msra.mxu0 0.0
  %1212 = vmatprep.subr.mxu0 0.0
  %1213 = vmatpush1.msra.mxu0 0.0
  %1214 = vmatprep.subr.mxu0 0.0
  %1215 = vmatpush1.msra.mxu0 0.0
  %1216 = vmatprep.subr.mxu0 0.0
  %1217 = vmatpush1.msra.mxu0 0.0
  %1218 = vmatprep.subr.mxu0 0.0
  %1219 = vmatpush1.msra.mxu0 0.0
  %1220 = vmatprep.subr.mxu0 0.0
  %1221 = vmatpush1.msra.mxu0 0.0
  %1222 = vmatprep.subr.mxu0 0.0
  %1223 = vmatpush1.msra.mxu0 0.0
  %1224 = vmatprep.subr.mxu0 0.0
  %1225 = vmatpush1.msra.mxu0 0.0
  %1226 = vmatprep.subr.mxu0 0.0
  %1227 = vmatpush1.msra.mxu0 0.0
  %1228 = vmatprep.subr.mxu0 0.0
  %1229 = vmatpush1.msra.mxu0 0.0
  %1230 = vmatprep.subr.mxu0 0.0
  %1231 = vmatpush1.msra.mxu0 0.0
  %1232 = vmatprep.subr.mxu0 0.0
  %1233 = vmatpush1.msra.mxu0 0.0
  %1234 = vmatprep.subr.mxu0 0.0
  %1235 = vmatpush1.msra.mxu0 0.0
  %1236 = vmatprep.subr.mxu0 0.0
  %1237 = vmatpush1.msra.mxu0 0.0
  %1238 = vmatprep.subr.mxu0 0.0
  %1239 = vmatpush1.msra.mxu0 0.0
  %1240 = vmatprep.mubr.f32.mxu0 0.0
  %1241 = vmatmul.mubr.f32.gmra.mrb[0].mxu0 %v1153
  %v1242 = vpop.f32.mrb[0].mxu0
  %v1243 = vadd.f32 %v1150, %v1242
  %v1244 = vpop.f32.mrb[0].mxu0
  %1245 = vmatprep.mubr.f32.mxu0 0.0
  %1246 = vmatmul.mubr.f32.gmra.mrb[0].mxu0 %v1156
  %v1247 = vpop.f32.mrb[0].mxu0
  %v1248 = vadd.f32 %v1150, %v1247
  %v1249 = vpop.f32.mrb[0].mxu0
  %1250 = vmatprep.mubr.f32.mxu0 0.0
  %1251 = vmatmul.mubr.f32.gmra.mrb[0].mxu0 %v1159
  %v1252 = vpop.f32.mrb[0].mxu0
  %v1253 = vadd.f32 %v1150, %v1252
  %v1254 = vpop.f32.mrb[0].mxu0
  %1255 = vmatprep.mubr.f32.mxu0 0.0
  %1256 = vmatmul.mubr.f32.gmra.mrb[0].mxu0 %v1162
  %v1257 = vpop.f32.mrb[0].mxu0
  %v1258 = vadd.f32 %v1150, %v1257
  %v1259 = vpop.f32.mrb[0].mxu0
  %1260 = vmatprep.mubr.f32.mxu0 0.0
  %1261 = vmatmul.mubr.f32.gmra.mrb[0].mxu0 %v1165
  %v1262 = vpop.f32.mrb[0].mxu0
  %v1263 = vadd.f32 %v1150, %v1262
  %v1264 = vpop.f32.mrb[0].mxu0
  %1265 = vmatprep.mubr.f32.mxu0 0.0
  %1266 = vmatmul.mubr.f32.gmra.mrb[0].mxu0 %v1168
  %v1267 = vpop.f32.mrb[0].mxu0
  %v1268 = vadd.f32 %v1150, %v1267
  %v1269 = vpop.f32.mrb[0].mxu0
  %1270 = vmatprep.mubr.f32.mxu0 0.0
  %1271 = vmatmul.mubr.f32.gmra.mrb[0].mxu0 %v1171
  %v1272 = vpop.f32.mrb[0].mxu0
  %v1273 = vadd.f32 %v1150, %v1272
  %v1274 = vpop.f32.mrb[0].mxu0
  %1275 = vmatprep.mubr.f32.mxu0 0.0
  %1276 = vmatmul.mubr.f32.gmra.mrb[0].mxu0 %v1174
  %v1277 = vpop.f32.mrb[0].mxu0
  %v1278 = vadd.f32 %v1150, %v1277
  %v1279 = vpop.f32.mrb[0].mxu0
  %1280 = vdwg.mxu0
  %1281 = vmatprep.subr.mxu0 0.0
  %1282 = vmatpush1.msra.mxu0 %v1141
  %1283 = vmatprep.subr.mxu0 0.0
  %1284 = vmatpush1.msra.mxu0 %v1142
  %1285 = vmatprep.subr.mxu0 0.0
  %1286 = vmatpush1.msra.mxu0 %v1143
  %1287 = vmatprep.subr.mxu0 0.0
  %1288 = vmatpush1.msra.mxu0 %v1144
  %1289 = vmatprep.subr.mxu0 0.0
  %1290 = vmatpush1.msra.mxu0 0.0
  %1291 = vmatprep.subr.mxu0 0.0
  %1292 = vmatpush1.msra.mxu0 0.0
  %1293 = vmatprep.subr.mxu0 0.0
  %1294 = vmatpush1.msra.mxu0 0.0
  %1295 = vmatprep.subr.mxu0 0.0
  %1296 = vmatpush1.msra.mxu0 0.0
  %1297 = vmatprep.subr.mxu0 0.0
  %1298 = vmatpush1.msra.mxu0 0.0
  %1299 = vmatprep.subr.mxu0 0.0
  %1300 = vmatpush1.msra.mxu0 0.0
  %1301 = vmatprep.subr.mxu0 0.0
  %1302 = vmatpush1.msra.mxu0 0.0
  %1303 = vmatprep.subr.mxu0 0.0
  %1304 = vmatpush1.msra.mxu0 0.0
  %1305 = vmatprep.subr.mxu0 0.0
  %1306 = vmatpush1.msra.mxu0 0.0
  %1307 = vmatprep.subr.mxu0 0.0
  %1308 = vmatpush1.msra.mxu0 0.0
  %1309 = vmatprep.subr.mxu0 0.0
  %1310 = vmatpush1.msra.mxu0 0.0
  %1311 = vmatprep.subr.mxu0 0.0
  %1312 = vmatpush1.msra.mxu0 0.0
  %1313 = vmatprep.subr.mxu0 0.0
  %1314 = vmatpush1.msra.mxu0 0.0
  %1315 = vmatprep.subr.mxu0 0.0
  %1316 = vmatpush1.msra.mxu0 0.0
  %1317 = vmatprep.subr.mxu0 0.0
  %1318 = vmatpush1.msra.mxu0 0.0
  %1319 = vmatprep.subr.mxu0 0.0
  %1320 = vmatpush1.msra.mxu0 0.0
  %1321 = vmatprep.subr.mxu0 0.0
  %1322 = vmatpush1.msra.mxu0 0.0
  %1323 = vmatprep.subr.mxu0 0.0
  %1324 = vmatpush1.msra.mxu0 0.0
  %1325 = vmatprep.subr.mxu0 0.0
  %1326 = vmatpush1.msra.mxu0 0.0
  %1327 = vmatprep.subr.mxu0 0.0
  %1328 = vmatpush1.msra.mxu0 0.0
  %1329 = vmatprep.subr.mxu0 0.0
  %1330 = vmatpush1.msra.mxu0 0.0
  %1331 = vmatprep.subr.mxu0 0.0
  %1332 = vmatpush1.msra.mxu0 0.0
  %1333 = vmatprep.subr.mxu0 0.0
  %1334 = vmatpush1.msra.mxu0 0.0
  %1335 = vmatprep.subr.mxu0 0.0
  %1336 = vmatpush1.msra.mxu0 0.0
  %1337 = vmatprep.subr.mxu0 0.0
  %1338 = vmatpush1.msra.mxu0 0.0
  %1339 = vmatprep.subr.mxu0 0.0
  %1340 = vmatpush1.msra.mxu0 0.0
  %1341 = vmatprep.subr.mxu0 0.0
  %1342 = vmatpush1.msra.mxu0 0.0
  %1343 = vmatprep.subr.mxu0 0.0
  %1344 = vmatpush1.msra.mxu0 0.0
  %1345 = vmatprep.mubr.f32.mxu0 0.0
  %1346 = vmatmul.mubr.f32.gmra.mrb[0].mxu0 %v313
  %v1347 = vpop.f32.mrb[0].mxu0
  %v1348 = vadd.f32 0.0, %v1347
  %v1349 = vpop.f32.mrb[0].mxu0
  %1350 = vdwg.mxu0
  %v1351 = vadd.f32 %v1243, %v1348
  %v1352 = vxor.u32 %v1351, 2147483648
  %v1353 = vmul.f32 %v1352, 1.442695
  %v1354 = vpow.pop %v1353
  %v1355 = vadd.f32 %v1354, 1.0
  %v1356 = vrcp.pop %v1355
  %v1357 = vmul.f32 1.0, %v1356
  %v1358 = vtanh.pop %v1351
  %v1359 = vmul.f32 %v1357, 0.0
  %1361 = vrot.lane.b32.xlu0 %v1358, 64
  %v1362 = vpop.permute.xlu0 %1361
  %v1364 = vmul.f32 %v1357, %v1362
  %1366 = vrot.lane.b32.xlu0 %v1364, 32
  %v1367 = vpop.permute.xlu0 %1366
  %v1369 = vadd.f32 %v1359, %v1367
  %v1370 = vtanh.pop %v1369
  %1372 = vrot.lane.b32.xlu0 %v1370, 64
  %v1373 = vpop.permute.xlu0 %1372
  %v1375 = vmul.f32 %v1357, %v1373
  %1377 = vrot.lane.b32.xlu0 %v1375, 32
  %v1378 = vpop.permute.xlu0 %1377
  %v1379 = vsel %vm311, %v1378, 0
  %1381 = vmatprep.subr.mxu0 0.0
  %1382 = vmatpush1.msra.mxu0 %v1141
  %1383 = vmatprep.subr.mxu0 0.0
  %1384 = vmatpush1.msra.mxu0 %v1142
  %1385 = vmatprep.subr.mxu0 0.0
  %1386 = vmatpush1.msra.mxu0 %v1143
  %1387 = vmatprep.subr.mxu0 0.0
  %1388 = vmatpush1.msra.mxu0 %v1144
  %1389 = vmatprep.subr.mxu0 0.0
  %1390 = vmatpush1.msra.mxu0 0.0
  %1391 = vmatprep.subr.mxu0 0.0
  %1392 = vmatpush1.msra.mxu0 0.0
  %1393 = vmatprep.subr.mxu0 0.0
  %1394 = vmatpush1.msra.mxu0 0.0
  %1395 = vmatprep.subr.mxu0 0.0
  %1396 = vmatpush1.msra.mxu0 0.0
  %1397 = vmatprep.subr.mxu0 0.0
  %1398 = vmatpush1.msra.mxu0 0.0
  %1399 = vmatprep.subr.mxu0 0.0
  %1400 = vmatpush1.msra.mxu0 0.0
  %1401 = vmatprep.subr.mxu0 0.0
  %1402 = vmatpush1.msra.mxu0 0.0
  %1403 = vmatprep.subr.mxu0 0.0
  %1404 = vmatpush1.msra.mxu0 0.0
  %1405 = vmatprep.subr.mxu0 0.0
  %1406 = vmatpush1.msra.mxu0 0.0
  %1407 = vmatprep.subr.mxu0 0.0
  %1408 = vmatpush1.msra.mxu0 0.0
  %1409 = vmatprep.subr.mxu0 0.0
  %1410 = vmatpush1.msra.mxu0 0.0
  %1411 = vmatprep.subr.mxu0 0.0
  %1412 = vmatpush1.msra.mxu0 0.0
  %1413 = vmatprep.subr.mxu0 0.0
  %1414 = vmatpush1.msra.mxu0 0.0
  %1415 = vmatprep.subr.mxu0 0.0
  %1416 = vmatpush1.msra.mxu0 0.0
  %1417 = vmatprep.subr.mxu0 0.0
  %1418 = vmatpush1.msra.mxu0 0.0
  %1419 = vmatprep.subr.mxu0 0.0
  %1420 = vmatpush1.msra.mxu0 0.0
  %1421 = vmatprep.subr.mxu0 0.0
  %1422 = vmatpush1.msra.mxu0 0.0
  %1423 = vmatprep.subr.mxu0 0.0
  %1424 = vmatpush1.msra.mxu0 0.0
  %1425 = vmatprep.subr.mxu0 0.0
  %1426 = vmatpush1.msra.mxu0 0.0
  %1427 = vmatprep.subr.mxu0 0.0
  %1428 = vmatpush1.msra.mxu0 0.0
  %1429 = vmatprep.subr.mxu0 0.0
  %1430 = vmatpush1.msra.mxu0 0.0
  %1431 = vmatprep.subr.mxu0 0.0
  %1432 = vmatpush1.msra.mxu0 0.0
  %1433 = vmatprep.subr.mxu0 0.0
  %1434 = vmatpush1.msra.mxu0 0.0
  %1435 = vmatprep.subr.mxu0 0.0
  %1436 = vmatpush1.msra.mxu0 0.0
  %1437 = vmatprep.subr.mxu0 0.0
  %1438 = vmatpush1.msra.mxu0 0.0
  %1439 = vmatprep.subr.mxu0 0.0
  %1440 = vmatpush1.msra.mxu0 0.0
  %1441 = vmatprep.subr.mxu0 0.0
  %1442 = vmatpush1.msra.mxu0 0.0
  %1443 = vmatprep.subr.mxu0 0.0
  %1444 = vmatpush1.msra.mxu0 0.0
  %1445 = vmatprep.mubr.f32.mxu0 0.0
  %1446 = vmatmul.mubr.f32.gmra.mrb[0].mxu0 %v1379
  %v1447 = vpop.f32.mrb[0].mxu0
  %v1448 = vadd.f32 0.0, %v1447
  %v1449 = vpop.f32.mrb[0].mxu0
  %1450 = vdwg.mxu0
  %v1451 = vadd.f32 %v1248, %v1448
  %v1452 = vxor.u32 %v1451, 2147483648
  %v1453 = vmul.f32 %v1452, 1.442695
  %v1454 = vpow.pop %v1453
  %v1455 = vadd.f32 %v1454, 1.0
  %v1456 = vrcp.pop %v1455
  %v1457 = vmul.f32 1.0, %v1456
  %v1458 = vtanh.pop %v1451
  %v1459 = vmul.f32 %v1457, %v1369
  %1461 = vrot.lane.b32.xlu0 %v1458, 64
  %v1462 = vpop.permute.xlu0 %1461
  %v1464 = vmul.f32 %v1457, %v1462
  %1466 = vrot.lane.b32.xlu0 %v1464, 32
  %v1467 = vpop.permute.xlu0 %1466
  %v1469 = vadd.f32 %v1459, %v1467
  %v1470 = vtanh.pop %v1469
  %1472 = vrot.lane.b32.xlu0 %v1470, 64
  %v1473 = vpop.permute.xlu0 %1472
  %v1475 = vmul.f32 %v1457, %v1473
  %1477 = vrot.lane.b32.xlu0 %v1475, 32
  %v1478 = vpop.permute.xlu0 %1477
  %v1479 = vsel %vm311, %v1478, 0
  %1481 = vmatprep.subr.mxu0 0.0
  %1482 = vmatpush1.msra.mxu0 %v1141
  %1483 = vmatprep.subr.mxu0 0.0
  %1484 = vmatpush1.msra.mxu0 %v1142
  %1485 = vmatprep.subr.mxu0 0.0
  %1486 = vmatpush1.msra.mxu0 %v1143
  %1487 = vmatprep.subr.mxu0 0.0
  %1488 = vmatpush1.msra.mxu0 %v1144
  %1489 = vmatprep.subr.mxu0 0.0
  %1490 = vmatpush1.msra.mxu0 0.0
  %1491 = vmatprep.subr.mxu0 0.0
  %1492 = vmatpush1.msra.mxu0 0.0
  %1493 = vmatprep.subr.mxu0 0.0
  %1494 = vmatpush1.msra.mxu0 0.0
  %1495 = vmatprep.subr.mxu0 0.0
  %1496 = vmatpush1.msra.mxu0 0.0
  %1497 = vmatprep.subr.mxu0 0.0
  %1498 = vmatpush1.msra.mxu0 0.0
  %1499 = vmatprep.subr.mxu0 0.0
  %1500 = vmatpush1.msra.mxu0 0.0
  %1501 = vmatprep.subr.mxu0 0.0
  %1502 = vmatpush1.msra.mxu0 0.0
  %1503 = vmatprep.subr.mxu0 0.0
  %1504 = vmatpush1.msra.mxu0 0.0
  %1505 = vmatprep.subr.mxu0 0.0
  %1506 = vmatpush1.msra.mxu0 0.0
  %1507 = vmatprep.subr.mxu0 0.0
  %1508 = vmatpush1.msra.mxu0 0.0
  %1509 = vmatprep.subr.mxu0 0.0
  %1510 = vmatpush1.msra.mxu0 0.0
  %1511 = vmatprep.subr.mxu0 0.0
  %1512 = vmatpush1.msra.mxu0 0.0
  %1513 = vmatprep.subr.mxu0 0.0
  %1514 = vmatpush1.msra.mxu0 0.0
  %1515 = vmatprep.subr.mxu0 0.0
  %1516 = vmatpush1.msra.mxu0 0.0
  %1517 = vmatprep.subr.mxu0 0.0
  %1518 = vmatpush1.msra.mxu0 0.0
  %1519 = vmatprep.subr.mxu0 0.0
  %1520 = vmatpush1.msra.mxu0 0.0
  %1521 = vmatprep.subr.mxu0 0.0
  %1522 = vmatpush1.msra.mxu0 0.0
  %1523 = vmatprep.subr.mxu0 0.0
  %1524 = vmatpush1.msra.mxu0 0.0
  %1525 = vmatprep.subr.mxu0 0.0
  %1526 = vmatpush1.msra.mxu0 0.0
  %1527 = vmatprep.subr.mxu0 0.0
  %1528 = vmatpush1.msra.mxu0 0.0
  %1529 = vmatprep.subr.mxu0 0.0
  %1530 = vmatpush1.msra.mxu0 0.0
  %1531 = vmatprep.subr.mxu0 0.0
  %1532 = vmatpush1.msra.mxu0 0.0
  %1533 = vmatprep.subr.mxu0 0.0
  %1534 = vmatpush1.msra.mxu0 0.0
  %1535 = vmatprep.subr.mxu0 0.0
  %1536 = vmatpush1.msra.mxu0 0.0
  %1537 = vmatprep.subr.mxu0 0.0
  %1538 = vmatpush1.msra.mxu0 0.0
  %1539 = vmatprep.subr.mxu0 0.0
  %1540 = vmatpush1.msra.mxu0 0.0
  %1541 = vmatprep.subr.mxu0 0.0
  %1542 = vmatpush1.msra.mxu0 0.0
  %1543 = vmatprep.subr.mxu0 0.0
  %1544 = vmatpush1.msra.mxu0 0.0
  %1545 = vmatprep.mubr.f32.mxu0 0.0
  %1546 = vmatmul.mubr.f32.gmra.mrb[0].mxu0 %v1479
  %v1547 = vpop.f32.mrb[0].mxu0
  %v1548 = vadd.f32 0.0, %v1547
  %v1549 = vpop.f32.mrb[0].mxu0
  %1550 = vdwg.mxu0
  %v1551 = vadd.f32 %v1253, %v1548
  %v1552 = vxor.u32 %v1551, 2147483648
  %v1553 = vmul.f32 %v1552, 1.442695
  %v1554 = vpow.pop %v1553
  %v1555 = vadd.f32 %v1554, 1.0
  %v1556 = vrcp.pop %v1555
  %v1557 = vmul.f32 1.0, %v1556
  %v1558 = vtanh.pop %v1551
  %v1559 = vmul.f32 %v1557, %v1469
  %1561 = vrot.lane.b32.xlu0 %v1558, 64
  %v1562 = vpop.permute.xlu0 %1561
  %v1564 = vmul.f32 %v1557, %v1562
  %1566 = vrot.lane.b32.xlu0 %v1564, 32
  %v1567 = vpop.permute.xlu0 %1566
  %v1569 = vadd.f32 %v1559, %v1567
  %v1570 = vtanh.pop %v1569
  %1572 = vrot.lane.b32.xlu0 %v1570, 64
  %v1573 = vpop.permute.xlu0 %1572
  %v1575 = vmul.f32 %v1557, %v1573
  %1577 = vrot.lane.b32.xlu0 %v1575, 32
  %v1578 = vpop.permute.xlu0 %1577
  %v1579 = vsel %vm311, %v1578, 0
  %1581 = vmatprep.subr.mxu0 0.0
  %1582 = vmatpush1.msra.mxu0 %v1141
  %1583 = vmatprep.subr.mxu0 0.0
  %1584 = vmatpush1.msra.mxu0 %v1142
  %1585 = vmatprep.subr.mxu0 0.0
  %1586 = vmatpush1.msra.mxu0 %v1143
  %1587 = vmatprep.subr.mxu0 0.0
  %1588 = vmatpush1.msra.mxu0 %v1144
  %1589 = vmatprep.subr.mxu0 0.0
  %1590 = vmatpush1.msra.mxu0 0.0
  %1591 = vmatprep.subr.mxu0 0.0
  %1592 = vmatpush1.msra.mxu0 0.0
  %1593 = vmatprep.subr.mxu0 0.0
  %1594 = vmatpush1.msra.mxu0 0.0
  %1595 = vmatprep.subr.mxu0 0.0
  %1596 = vmatpush1.msra.mxu0 0.0
  %1597 = vmatprep.subr.mxu0 0.0
  %1598 = vmatpush1.msra.mxu0 0.0
  %1599 = vmatprep.subr.mxu0 0.0
  %1600 = vmatpush1.msra.mxu0 0.0
  %1601 = vmatprep.subr.mxu0 0.0
  %1602 = vmatpush1.msra.mxu0 0.0
  %1603 = vmatprep.subr.mxu0 0.0
  %1604 = vmatpush1.msra.mxu0 0.0
  %1605 = vmatprep.subr.mxu0 0.0
  %1606 = vmatpush1.msra.mxu0 0.0
  %1607 = vmatprep.subr.mxu0 0.0
  %1608 = vmatpush1.msra.mxu0 0.0
  %1609 = vmatprep.subr.mxu0 0.0
  %1610 = vmatpush1.msra.mxu0 0.0
  %1611 = vmatprep.subr.mxu0 0.0
  %1612 = vmatpush1.msra.mxu0 0.0
  %1613 = vmatprep.subr.mxu0 0.0
  %1614 = vmatpush1.msra.mxu0 0.0
  %1615 = vmatprep.subr.mxu0 0.0
  %1616 = vmatpush1.msra.mxu0 0.0
  %1617 = vmatprep.subr.mxu0 0.0
  %1618 = vmatpush1.msra.mxu0 0.0
  %1619 = vmatprep.subr.mxu0 0.0
  %1620 = vmatpush1.msra.mxu0 0.0
  %1621 = vmatprep.subr.mxu0 0.0
  %1622 = vmatpush1.msra.mxu0 0.0
  %1623 = vmatprep.subr.mxu0 0.0
  %1624 = vmatpush1.msra.mxu0 0.0
  %1625 = vmatprep.subr.mxu0 0.0
  %1626 = vmatpush1.msra.mxu0 0.0
  %1627 = vmatprep.subr.mxu0 0.0
  %1628 = vmatpush1.msra.mxu0 0.0
  %1629 = vmatprep.subr.mxu0 0.0
  %1630 = vmatpush1.msra.mxu0 0.0
  %1631 = vmatprep.subr.mxu0 0.0
  %1632 = vmatpush1.msra.mxu0 0.0
  %1633 = vmatprep.subr.mxu0 0.0
  %1634 = vmatpush1.msra.mxu0 0.0
  %1635 = vmatprep.subr.mxu0 0.0
  %1636 = vmatpush1.msra.mxu0 0.0
  %1637 = vmatprep.subr.mxu0 0.0
  %1638 = vmatpush1.msra.mxu0 0.0
  %1639 = vmatprep.subr.mxu0 0.0
  %1640 = vmatpush1.msra.mxu0 0.0
  %1641 = vmatprep.subr.mxu0 0.0
  %1642 = vmatpush1.msra.mxu0 0.0
  %1643 = vmatprep.subr.mxu0 0.0
  %1644 = vmatpush1.msra.mxu0 0.0
  %1645 = vmatprep.mubr.f32.mxu0 0.0
  %1646 = vmatmul.mubr.f32.gmra.mrb[0].mxu0 %v1579
  %v1647 = vpop.f32.mrb[0].mxu0
  %v1648 = vadd.f32 0.0, %v1647
  %v1649 = vpop.f32.mrb[0].mxu0
  %1650 = vdwg.mxu0
  %v1651 = vadd.f32 %v1258, %v1648
  %v1652 = vxor.u32 %v1651, 2147483648
  %v1653 = vmul.f32 %v1652, 1.442695
  %v1654 = vpow.pop %v1653
  %v1655 = vadd.f32 %v1654, 1.0
  %v1656 = vrcp.pop %v1655
  %v1657 = vmul.f32 1.0, %v1656
  %v1658 = vtanh.pop %v1651
  %v1659 = vmul.f32 %v1657, %v1569
  %1661 = vrot.lane.b32.xlu0 %v1658, 64
  %v1662 = vpop.permute.xlu0 %1661
  %v1664 = vmul.f32 %v1657, %v1662
  %1666 = vrot.lane.b32.xlu0 %v1664, 32
  %v1667 = vpop.permute.xlu0 %1666
  %v1669 = vadd.f32 %v1659, %v1667
  %v1670 = vtanh.pop %v1669
  %1672 = vrot.lane.b32.xlu0 %v1670, 64
  %v1673 = vpop.permute.xlu0 %1672
  %v1675 = vmul.f32 %v1657, %v1673
  %1677 = vrot.lane.b32.xlu0 %v1675, 32
  %v1678 = vpop.permute.xlu0 %1677
  %v1679 = vsel %vm311, %v1678, 0
  %1681 = vmatprep.subr.mxu0 0.0
  %1682 = vmatpush1.msra.mxu0 %v1141
  %1683 = vmatprep.subr.mxu0 0.0
  %1684 = vmatpush1.msra.mxu0 %v1142
  %1685 = vmatprep.subr.mxu0 0.0
  %1686 = vmatpush1.msra.mxu0 %v1143
  %1687 = vmatprep.subr.mxu0 0.0
  %1688 = vmatpush1.msra.mxu0 %v1144
  %1689 = vmatprep.subr.mxu0 0.0
  %1690 = vmatpush1.msra.mxu0 0.0
  %1691 = vmatprep.subr.mxu0 0.0
  %1692 = vmatpush1.msra.mxu0 0.0
  %1693 = vmatprep.subr.mxu0 0.0
  %1694 = vmatpush1.msra.mxu0 0.0
  %1695 = vmatprep.subr.mxu0 0.0
  %1696 = vmatpush1.msra.mxu0 0.0
  %1697 = vmatprep.subr.mxu0 0.0
  %1698 = vmatpush1.msra.mxu0 0.0
  %1699 = vmatprep.subr.mxu0 0.0
  %1700 = vmatpush1.msra.mxu0 0.0
  %1701 = vmatprep.subr.mxu0 0.0
  %1702 = vmatpush1.msra.mxu0 0.0
  %1703 = vmatprep.subr.mxu0 0.0
  %1704 = vmatpush1.msra.mxu0 0.0
  %1705 = vmatprep.subr.mxu0 0.0
  %1706 = vmatpush1.msra.mxu0 0.0
  %1707 = vmatprep.subr.mxu0 0.0
  %1708 = vmatpush1.msra.mxu0 0.0
  %1709 = vmatprep.subr.mxu0 0.0
  %1710 = vmatpush1.msra.mxu0 0.0
  %1711 = vmatprep.subr.mxu0 0.0
  %1712 = vmatpush1.msra.mxu0 0.0
  %1713 = vmatprep.subr.mxu0 0.0
  %1714 = vmatpush1.msra.mxu0 0.0
  %1715 = vmatprep.subr.mxu0 0.0
  %1716 = vmatpush1.msra.mxu0 0.0
  %1717 = vmatprep.subr.mxu0 0.0
  %1718 = vmatpush1.msra.mxu0 0.0
  %1719 = vmatprep.subr.mxu0 0.0
  %1720 = vmatpush1.msra.mxu0 0.0
  %1721 = vmatprep.subr.mxu0 0.0
  %1722 = vmatpush1.msra.mxu0 0.0
  %1723 = vmatprep.subr.mxu0 0.0
  %1724 = vmatpush1.msra.mxu0 0.0
  %1725 = vmatprep.subr.mxu0 0.0
  %1726 = vmatpush1.msra.mxu0 0.0
  %1727 = vmatprep.subr.mxu0 0.0
  %1728 = vmatpush1.msra.mxu0 0.0
  %1729 = vmatprep.subr.mxu0 0.0
  %1730 = vmatpush1.msra.mxu0 0.0
  %1731 = vmatprep.subr.mxu0 0.0
  %1732 = vmatpush1.msra.mxu0 0.0
  %1733 = vmatprep.subr.mxu0 0.0
  %1734 = vmatpush1.msra.mxu0 0.0
  %1735 = vmatprep.subr.mxu0 0.0
  %1736 = vmatpush1.msra.mxu0 0.0
  %1737 = vmatprep.subr.mxu0 0.0
  %1738 = vmatpush1.msra.mxu0 0.0
  %1739 = vmatprep.subr.mxu0 0.0
  %1740 = vmatpush1.msra.mxu0 0.0
  %1741 = vmatprep.subr.mxu0 0.0
  %1742 = vmatpush1.msra.mxu0 0.0
  %1743 = vmatprep.subr.mxu0 0.0
  %1744 = vmatpush1.msra.mxu0 0.0
  %1745 = vmatprep.mubr.f32.mxu0 0.0
  %1746 = vmatmul.mubr.f32.gmra.mrb[0].mxu0 %v1679
  %v1747 = vpop.f32.mrb[0].mxu0
  %v1748 = vadd.f32 0.0, %v1747
  %v1749 = vpop.f32.mrb[0].mxu0
  %1750 = vdwg.mxu0
  %v1751 = vadd.f32 %v1263, %v1748
  %v1752 = vxor.u32 %v1751, 2147483648
  %v1753 = vmul.f32 %v1752, 1.442695
  %v1754 = vpow.pop %v1753
  %v1755 = vadd.f32 %v1754, 1.0
  %v1756 = vrcp.pop %v1755
  %v1757 = vmul.f32 1.0, %v1756
  %v1758 = vtanh.pop %v1751
  %v1759 = vmul.f32 %v1757, %v1669
  %1761 = vrot.lane.b32.xlu0 %v1758, 64
  %v1762 = vpop.permute.xlu0 %1761
  %v1764 = vmul.f32 %v1757, %v1762
  %1766 = vrot.lane.b32.xlu0 %v1764, 32
  %v1767 = vpop.permute.xlu0 %1766
  %v1769 = vadd.f32 %v1759, %v1767
  %v1770 = vtanh.pop %v1769
  %1772 = vrot.lane.b32.xlu0 %v1770, 64
  %v1773 = vpop.permute.xlu0 %1772
  %v1775 = vmul.f32 %v1757, %v1773
  %1777 = vrot.lane.b32.xlu0 %v1775, 32
  %v1778 = vpop.permute.xlu0 %1777
  %v1779 = vsel %vm311, %v1778, 0
  %1781 = vmatprep.subr.mxu0 0.0
  %1782 = vmatpush1.msra.mxu0 %v1141
  %1783 = vmatprep.subr.mxu0 0.0
  %1784 = vmatpush1.msra.mxu0 %v1142
  %1785 = vmatprep.subr.mxu0 0.0
  %1786 = vmatpush1.msra.mxu0 %v1143
  %1787 = vmatprep.subr.mxu0 0.0
  %1788 = vmatpush1.msra.mxu0 %v1144
  %1789 = vmatprep.subr.mxu0 0.0
  %1790 = vmatpush1.msra.mxu0 0.0
  %1791 = vmatprep.subr.mxu0 0.0
  %1792 = vmatpush1.msra.mxu0 0.0
  %1793 = vmatprep.subr.mxu0 0.0
  %1794 = vmatpush1.msra.mxu0 0.0
  %1795 = vmatprep.subr.mxu0 0.0
  %1796 = vmatpush1.msra.mxu0 0.0
  %1797 = vmatprep.subr.mxu0 0.0
  %1798 = vmatpush1.msra.mxu0 0.0
  %1799 = vmatprep.subr.mxu0 0.0
  %1800 = vmatpush1.msra.mxu0 0.0
  %1801 = vmatprep.subr.mxu0 0.0
  %1802 = vmatpush1.msra.mxu0 0.0
  %1803 = vmatprep.subr.mxu0 0.0
  %1804 = vmatpush1.msra.mxu0 0.0
  %1805 = vmatprep.subr.mxu0 0.0
  %1806 = vmatpush1.msra.mxu0 0.0
  %1807 = vmatprep.subr.mxu0 0.0
  %1808 = vmatpush1.msra.mxu0 0.0
  %1809 = vmatprep.subr.mxu0 0.0
  %1810 = vmatpush1.msra.mxu0 0.0
  %1811 = vmatprep.subr.mxu0 0.0
  %1812 = vmatpush1.msra.mxu0 0.0
  %1813 = vmatprep.subr.mxu0 0.0
  %1814 = vmatpush1.msra.mxu0 0.0
  %1815 = vmatprep.subr.mxu0 0.0
  %1816 = vmatpush1.msra.mxu0 0.0
  %1817 = vmatprep.subr.mxu0 0.0
  %1818 = vmatpush1.msra.mxu0 0.0
  %1819 = vmatprep.subr.mxu0 0.0
  %1820 = vmatpush1.msra.mxu0 0.0
  %1821 = vmatprep.subr.mxu0 0.0
  %1822 = vmatpush1.msra.mxu0 0.0
  %1823 = vmatprep.subr.mxu0 0.0
  %1824 = vmatpush1.msra.mxu0 0.0
  %1825 = vmatprep.subr.mxu0 0.0
  %1826 = vmatpush1.msra.mxu0 0.0
  %1827 = vmatprep.subr.mxu0 0.0
  %1828 = vmatpush1.msra.mxu0 0.0
  %1829 = vmatprep.subr.mxu0 0.0
  %1830 = vmatpush1.msra.mxu0 0.0
  %1831 = vmatprep.subr.mxu0 0.0
  %1832 = vmatpush1.msra.mxu0 0.0
  %1833 = vmatprep.subr.mxu0 0.0
  %1834 = vmatpush1.msra.mxu0 0.0
  %1835 = vmatprep.subr.mxu0 0.0
  %1836 = vmatpush1.msra.mxu0 0.0
  %1837 = vmatprep.subr.mxu0 0.0
  %1838 = vmatpush1.msra.mxu0 0.0
  %1839 = vmatprep.subr.mxu0 0.0
  %1840 = vmatpush1.msra.mxu0 0.0
  %1841 = vmatprep.subr.mxu0 0.0
  %1842 = vmatpush1.msra.mxu0 0.0
  %1843 = vmatprep.subr.mxu0 0.0
  %1844 = vmatpush1.msra.mxu0 0.0
  %1845 = vmatprep.mubr.f32.mxu0 0.0
  %1846 = vmatmul.mubr.f32.gmra.mrb[0].mxu0 %v1779
  %v1847 = vpop.f32.mrb[0].mxu0
  %v1848 = vadd.f32 0.0, %v1847
  %v1849 = vpop.f32.mrb[0].mxu0
  %1850 = vdwg.mxu0
  %v1851 = vadd.f32 %v1268, %v1848
  %v1852 = vxor.u32 %v1851, 2147483648
  %v1853 = vmul.f32 %v1852, 1.442695
  %v1854 = vpow.pop %v1853
  %v1855 = vadd.f32 %v1854, 1.0
  %v1856 = vrcp.pop %v1855
  %v1857 = vmul.f32 1.0, %v1856
  %v1858 = vtanh.pop %v1851
  %v1859 = vmul.f32 %v1857, %v1769
  %1861 = vrot.lane.b32.xlu0 %v1858, 64
  %v1862 = vpop.permute.xlu0 %1861
  %v1864 = vmul.f32 %v1857, %v1862
  %1866 = vrot.lane.b32.xlu0 %v1864, 32
  %v1867 = vpop.permute.xlu0 %1866
  %v1869 = vadd.f32 %v1859, %v1867
  %v1870 = vtanh.pop %v1869
  %1872 = vrot.lane.b32.xlu0 %v1870, 64
  %v1873 = vpop.permute.xlu0 %1872
  %v1875 = vmul.f32 %v1857, %v1873
  %1877 = vrot.lane.b32.xlu0 %v1875, 32
  %v1878 = vpop.permute.xlu0 %1877
  %v1879 = vsel %vm311, %v1878, 0
  %1881 = vmatprep.subr.mxu0 0.0
  %1882 = vmatpush1.msra.mxu0 %v1141
  %1883 = vmatprep.subr.mxu0 0.0
  %1884 = vmatpush1.msra.mxu0 %v1142
  %1885 = vmatprep.subr.mxu0 0.0
  %1886 = vmatpush1.msra.mxu0 %v1143
  %1887 = vmatprep.subr.mxu0 0.0
  %1888 = vmatpush1.msra.mxu0 %v1144
  %1889 = vmatprep.subr.mxu0 0.0
  %1890 = vmatpush1.msra.mxu0 0.0
  %1891 = vmatprep.subr.mxu0 0.0
  %1892 = vmatpush1.msra.mxu0 0.0
  %1893 = vmatprep.subr.mxu0 0.0
  %1894 = vmatpush1.msra.mxu0 0.0
  %1895 = vmatprep.subr.mxu0 0.0
  %1896 = vmatpush1.msra.mxu0 0.0
  %1897 = vmatprep.subr.mxu0 0.0
  %1898 = vmatpush1.msra.mxu0 0.0
  %1899 = vmatprep.subr.mxu0 0.0
  %1900 = vmatpush1.msra.mxu0 0.0
  %1901 = vmatprep.subr.mxu0 0.0
  %1902 = vmatpush1.msra.mxu0 0.0
  %1903 = vmatprep.subr.mxu0 0.0
  %1904 = vmatpush1.msra.mxu0 0.0
  %1905 = vmatprep.subr.mxu0 0.0
  %1906 = vmatpush1.msra.mxu0 0.0
  %1907 = vmatprep.subr.mxu0 0.0
  %1908 = vmatpush1.msra.mxu0 0.0
  %1909 = vmatprep.subr.mxu0 0.0
  %1910 = vmatpush1.msra.mxu0 0.0
  %1911 = vmatprep.subr.mxu0 0.0
  %1912 = vmatpush1.msra.mxu0 0.0
  %1913 = vmatprep.subr.mxu0 0.0
  %1914 = vmatpush1.msra.mxu0 0.0
  %1915 = vmatprep.subr.mxu0 0.0
  %1916 = vmatpush1.msra.mxu0 0.0
  %1917 = vmatprep.subr.mxu0 0.0
  %1918 = vmatpush1.msra.mxu0 0.0
  %1919 = vmatprep.subr.mxu0 0.0
  %1920 = vmatpush1.msra.mxu0 0.0
  %1921 = vmatprep.subr.mxu0 0.0
  %1922 = vmatpush1.msra.mxu0 0.0
  %1923 = vmatprep.subr.mxu0 0.0
  %1924 = vmatpush1.msra.mxu0 0.0
  %1925 = vmatprep.subr.mxu0 0.0
  %1926 = vmatpush1.msra.mxu0 0.0
  %1927 = vmatprep.subr.mxu0 0.0
  %1928 = vmatpush1.msra.mxu0 0.0
  %1929 = vmatprep.subr.mxu0 0.0
  %1930 = vmatpush1.msra.mxu0 0.0
  %1931 = vmatprep.subr.mxu0 0.0
  %1932 = vmatpush1.msra.mxu0 0.0
  %1933 = vmatprep.subr.mxu0 0.0
  %1934 = vmatpush1.msra.mxu0 0.0
  %1935 = vmatprep.subr.mxu0 0.0
  %1936 = vmatpush1.msra.mxu0 0.0
  %1937 = vmatprep.subr.mxu0 0.0
  %1938 = vmatpush1.msra.mxu0 0.0
  %1939 = vmatprep.subr.mxu0 0.0
  %1940 = vmatpush1.msra.mxu0 0.0
  %1941 = vmatprep.subr.mxu0 0.0
  %1942 = vmatpush1.msra.mxu0 0.0
  %1943 = vmatprep.subr.mxu0 0.0
  %1944 = vmatpush1.msra.mxu0 0.0
  %1945 = vmatprep.mubr.f32.mxu0 0.0
  %1946 = vmatmul.mubr.f32.gmra.mrb[0].mxu0 %v1879
  %v1947 = vpop.f32.mrb[0].mxu0
  %v1948 = vadd.f32 0.0, %v1947
  %v1949 = vpop.f32.mrb[0].mxu0
  %1950 = vdwg.mxu0
  %v1951 = vadd.f32 %v1273, %v1948
  %v1952 = vxor.u32 %v1951, 2147483648
  %v1953 = vmul.f32 %v1952, 1.442695
  %v1954 = vpow.pop %v1953
  %v1955 = vadd.f32 %v1954, 1.0
  %v1956 = vrcp.pop %v1955
  %v1957 = vmul.f32 1.0, %v1956
  %v1958 = vtanh.pop %v1951
  %v1959 = vmul.f32 %v1957, %v1869
  %1961 = vrot.lane.b32.xlu0 %v1958, 64
  %v1962 = vpop.permute.xlu0 %1961
  %v1964 = vmul.f32 %v1957, %v1962
  %1966 = vrot.lane.b32.xlu0 %v1964, 32
  %v1967 = vpop.permute.xlu0 %1966
  %v1969 = vadd.f32 %v1959, %v1967
  %v1970 = vtanh.pop %v1969
  %1972 = vrot.lane.b32.xlu0 %v1970, 64
  %v1973 = vpop.permute.xlu0 %1972
  %v1975 = vmul.f32 %v1957, %v1973
  %1977 = vrot.lane.b32.xlu0 %v1975, 32
  %v1978 = vpop.permute.xlu0 %1977
  %v1979 = vsel %vm311, %v1978, 0
  %1981 = vmatprep.subr.mxu0 0.0
  %1982 = vmatpush1.msra.mxu0 %v1141
  %1983 = vmatprep.subr.mxu0 0.0
  %1984 = vmatpush1.msra.mxu0 %v1142
  %1985 = vmatprep.subr.mxu0 0.0
  %1986 = vmatpush1.msra.mxu0 %v1143
  %1987 = vmatprep.subr.mxu0 0.0
  %1988 = vmatpush1.msra.mxu0 %v1144
  %1989 = vmatprep.subr.mxu0 0.0
  %1990 = vmatpush1.msra.mxu0 0.0
  %1991 = vmatprep.subr.mxu0 0.0
  %1992 = vmatpush1.msra.mxu0 0.0
  %1993 = vmatprep.subr.mxu0 0.0
  %1994 = vmatpush1.msra.mxu0 0.0
  %1995 = vmatprep.subr.mxu0 0.0
  %1996 = vmatpush1.msra.mxu0 0.0
  %1997 = vmatprep.subr.mxu0 0.0
  %1998 = vmatpush1.msra.mxu0 0.0
  %1999 = vmatprep.subr.mxu0 0.0
  %2000 = vmatpush1.msra.mxu0 0.0
  %2001 = vmatprep.subr.mxu0 0.0
  %2002 = vmatpush1.msra.mxu0 0.0
  %2003 = vmatprep.subr.mxu0 0.0
  %2004 = vmatpush1.msra.mxu0 0.0
  %2005 = vmatprep.subr.mxu0 0.0
  %2006 = vmatpush1.msra.mxu0 0.0
  %2007 = vmatprep.subr.mxu0 0.0
  %2008 = vmatpush1.msra.mxu0 0.0
  %2009 = vmatprep.subr.mxu0 0.0
  %2010 = vmatpush1.msra.mxu0 0.0
  %2011 = vmatprep.subr.mxu0 0.0
  %2012 = vmatpush1.msra.mxu0 0.0
  %2013 = vmatprep.subr.mxu0 0.0
  %2014 = vmatpush1.msra.mxu0 0.0
  %2015 = vmatprep.subr.mxu0 0.0
  %2016 = vmatpush1.msra.mxu0 0.0
  %2017 = vmatprep.subr.mxu0 0.0
  %2018 = vmatpush1.msra.mxu0 0.0
  %2019 = vmatprep.subr.mxu0 0.0
  %2020 = vmatpush1.msra.mxu0 0.0
  %2021 = vmatprep.subr.mxu0 0.0
  %2022 = vmatpush1.msra.mxu0 0.0
  %2023 = vmatprep.subr.mxu0 0.0
  %2024 = vmatpush1.msra.mxu0 0.0
  %2025 = vmatprep.subr.mxu0 0.0
  %2026 = vmatpush1.msra.mxu0 0.0
  %2027 = vmatprep.subr.mxu0 0.0
  %2028 = vmatpush1.msra.mxu0 0.0
  %2029 = vmatprep.subr.mxu0 0.0
  %2030 = vmatpush1.msra.mxu0 0.0
  %2031 = vmatprep.subr.mxu0 0.0
  %2032 = vmatpush1.msra.mxu0 0.0
  %2033 = vmatprep.subr.mxu0 0.0
  %2034 = vmatpush1.msra.mxu0 0.0
  %2035 = vmatprep.subr.mxu0 0.0
  %2036 = vmatpush1.msra.mxu0 0.0
  %2037 = vmatprep.subr.mxu0 0.0
  %2038 = vmatpush1.msra.mxu0 0.0
  %2039 = vmatprep.subr.mxu0 0.0
  %2040 = vmatpush1.msra.mxu0 0.0
  %2041 = vmatprep.subr.mxu0 0.0
  %2042 = vmatpush1.msra.mxu0 0.0
  %2043 = vmatprep.subr.mxu0 0.0
  %2044 = vmatpush1.msra.mxu0 0.0
  %2045 = vmatprep.mubr.f32.mxu0 0.0
  %2046 = vmatmul.mubr.f32.gmra.mrb[0].mxu0 %v1979
  %v2047 = vpop.f32.mrb[0].mxu0
  %v2048 = vadd.f32 0.0, %v2047
  %v2049 = vpop.f32.mrb[0].mxu0
  %2050 = vdwg.mxu0
  %v2051 = vadd.f32 %v1278, %v2048
  %v2052 = vxor.u32 %v2051, 2147483648
  %v2053 = vmul.f32 %v2052, 1.442695
  %v2054 = vpow.pop %v2053
  %v2055 = vadd.f32 %v2054, 1.0
  %v2056 = vrcp.pop %v2055
  %v2057 = vmul.f32 1.0, %v2056
  %v2058 = vtanh.pop %v2051
  %v2059 = vmul.f32 %v2057, %v1969
  %2061 = vrot.lane.b32.xlu0 %v2058, 64
  %v2062 = vpop.permute.xlu0 %2061
  %v2064 = vmul.f32 %v2057, %v2062
  %2066 = vrot.lane.b32.xlu0 %v2064, 32
  %v2067 = vpop.permute.xlu0 %2066
  %v2069 = vadd.f32 %v2059, %v2067
  %v2070 = vtanh.pop %v2069
  %2072 = vrot.lane.b32.xlu0 %v2070, 64
  %v2073 = vpop.permute.xlu0 %2072
  %v2075 = vmul.f32 %v2057, %v2073
  %v2076 = vld [vmem:[%s7] sm:$0xff]
  %v2077 = vld [vmem:[%s7 + $0x8] sm:$0xff]
  %v2078 = vld [vmem:[%s7 + $0x10] sm:$0xff]
  %v2079 = vld [vmem:[%s7 + $0x18] sm:$0xff]
  %v2080 = vld [vmem:[%s8] sm:$0x1]
  %v2082 = vlaneseq
  %v2083 = vshrl.u32 %v2082, 7
  %v2084 = vsub.s32 0, %v2083
  %v2085 = vrot.slane %v2080, %v2084
  %2088 = vrot.lane.b32.xlu0 %v2075, 32
  %v2089 = vpop.permute.xlu0 %2088
  %v2090 = vsel %vm311, %v2089, 0
  %2092 = vmatprep.subr.mxu0 0.0
  %2093 = vmatpush1.msra.mxu0 %v2076
  %2094 = vmatprep.subr.mxu0 0.0
  %2095 = vmatpush1.msra.mxu0 %v2077
  %2096 = vmatprep.subr.mxu0 0.0
  %2097 = vmatpush1.msra.mxu0 %v2078
  %2098 = vmatprep.subr.mxu0 0.0
  %2099 = vmatpush1.msra.mxu0 %v2079
  %2100 = vmatprep.subr.mxu0 0.0
  %2101 = vmatpush1.msra.mxu0 0.0
  %2102 = vmatprep.subr.mxu0 0.0
  %2103 = vmatpush1.msra.mxu0 0.0
  %2104 = vmatprep.subr.mxu0 0.0
  %2105 = vmatpush1.msra.mxu0 0.0
  %2106 = vmatprep.subr.mxu0 0.0
  %2107 = vmatpush1.msra.mxu0 0.0
  %2108 = vmatprep.subr.mxu0 0.0
  %2109 = vmatpush1.msra.mxu0 0.0
  %2110 = vmatprep.subr.mxu0 0.0
  %2111 = vmatpush1.msra.mxu0 0.0
  %2112 = vmatprep.subr.mxu0 0.0
  %2113 = vmatpush1.msra.mxu0 0.0
  %2114 = vmatprep.subr.mxu0 0.0
  %2115 = vmatpush1.msra.mxu0 0.0
  %2116 = vmatprep.subr.mxu0 0.0
  %2117 = vmatpush1.msra.mxu0 0.0
  %2118 = vmatprep.subr.mxu0 0.0
  %2119 = vmatpush1.msra.mxu0 0.0
  %2120 = vmatprep.subr.mxu0 0.0
  %2121 = vmatpush1.msra.mxu0 0.0
  %2122 = vmatprep.subr.mxu0 0.0
  %2123 = vmatpush1.msra.mxu0 0.0
  %2124 = vmatprep.subr.mxu0 0.0
  %2125 = vmatpush1.msra.mxu0 0.0
  %2126 = vmatprep.subr.mxu0 0.0
  %2127 = vmatpush1.msra.mxu0 0.0
  %2128 = vmatprep.subr.mxu0 0.0
  %2129 = vmatpush1.msra.mxu0 0.0
  %2130 = vmatprep.subr.mxu0 0.0
  %2131 = vmatpush1.msra.mxu0 0.0
  %2132 = vmatprep.subr.mxu0 0.0
  %2133 = vmatpush1.msra.mxu0 0.0
  %2134 = vmatprep.subr.mxu0 0.0
  %2135 = vmatpush1.msra.mxu0 0.0
  %2136 = vmatprep.subr.mxu0 0.0
  %2137 = vmatpush1.msra.mxu0 0.0
  %2138 = vmatprep.subr.mxu0 0.0
  %2139 = vmatpush1.msra.mxu0 0.0
  %2140 = vmatprep.subr.mxu0 0.0
  %2141 = vmatpush1.msra.mxu0 0.0
  %2142 = vmatprep.subr.mxu0 0.0
  %2143 = vmatpush1.msra.mxu0 0.0
  %2144 = vmatprep.subr.mxu0 0.0
  %2145 = vmatpush1.msra.mxu0 0.0
  %2146 = vmatprep.subr.mxu0 0.0
  %2147 = vmatpush1.msra.mxu0 0.0
  %2148 = vmatprep.subr.mxu0 0.0
  %2149 = vmatpush1.msra.mxu0 0.0
  %2150 = vmatprep.subr.mxu0 0.0
  %2151 = vmatpush1.msra.mxu0 0.0
  %2152 = vmatprep.subr.mxu0 0.0
  %2153 = vmatpush1.msra.mxu0 0.0
  %2154 = vmatprep.subr.mxu0 0.0
  %2155 = vmatpush1.msra.mxu0 0.0
  %2156 = vmatprep.mubr.f32.mxu0 0.0
  %2157 = vmatmul.mubr.f32.gmra.mrb[0].mxu0 %v2090
  %v2158 = vpop.f32.mrb[0].mxu0
  %v2159 = vadd.f32 %v2085, %v2158
  %v2160 = vpop.f32.mrb[0].mxu0
  %2161 = vdwg.mxu0
  %v2162 = vmax.f32 %v2159, 0.0
  %v2163 = vld [vmem:[%s9] sm:$0xff]
  %v2164 = vld [vmem:[%s9 + $0x8] sm:$0xff]
  %v2165 = vld [vmem:[%s10] sm:$0x1]
  %v2167 = vlaneseq
  %v2168 = vshrl.u32 %v2167, 7
  %v2169 = vsub.s32 0, %v2168
  %v2170 = vrot.slane %v2165, %v2169
  %vm2172 = vcmask 130048
  %v2174 = vsel %vm2172, %v2162, 0
  %2176 = vmatprep.subr.mxu0 0.0
  %2177 = vmatpush1.msra.mxu0 %v2163
  %2178 = vmatprep.subr.mxu0 0.0
  %2179 = vmatpush1.msra.mxu0 %v2164
  %2180 = vmatprep.subr.mxu0 0.0
  %2181 = vmatpush1.msra.mxu0 0.0
  %2182 = vmatprep.subr.mxu0 0.0
  %2183 = vmatpush1.msra.mxu0 0.0
  %2184 = vmatprep.subr.mxu0 0.0
  %2185 = vmatpush1.msra.mxu0 0.0
  %2186 = vmatprep.subr.mxu0 0.0
  %2187 = vmatpush1.msra.mxu0 0.0
  %2188 = vmatprep.subr.mxu0 0.0
  %2189 = vmatpush1.msra.mxu0 0.0
  %2190 = vmatprep.subr.mxu0 0.0
  %2191 = vmatpush1.msra.mxu0 0.0
  %2192 = vmatprep.subr.mxu0 0.0
  %2193 = vmatpush1.msra.mxu0 0.0
  %2194 = vmatprep.subr.mxu0 0.0
  %2195 = vmatpush1.msra.mxu0 0.0
  %2196 = vmatprep.subr.mxu0 0.0
  %2197 = vmatpush1.msra.mxu0 0.0
  %2198 = vmatprep.subr.mxu0 0.0
  %2199 = vmatpush1.msra.mxu0 0.0
  %2200 = vmatprep.subr.mxu0 0.0
  %2201 = vmatpush1.msra.mxu0 0.0
  %2202 = vmatprep.subr.mxu0 0.0
  %2203 = vmatpush1.msra.mxu0 0.0
  %2204 = vmatprep.subr.mxu0 0.0
  %2205 = vmatpush1.msra.mxu0 0.0
  %2206 = vmatprep.subr.mxu0 0.0
  %2207 = vmatpush1.msra.mxu0 0.0
  %2208 = vmatprep.subr.mxu0 0.0
  %2209 = vmatpush1.msra.mxu0 0.0
  %2210 = vmatprep.subr.mxu0 0.0
  %2211 = vmatpush1.msra.mxu0 0.0
  %2212 = vmatprep.subr.mxu0 0.0
  %2213 = vmatpush1.msra.mxu0 0.0
  %2214 = vmatprep.subr.mxu0 0.0
  %2215 = vmatpush1.msra.mxu0 0.0
  %2216 = vmatprep.subr.mxu0 0.0
  %2217 = vmatpush1.msra.mxu0 0.0
  %2218 = vmatprep.subr.mxu0 0.0
  %2219 = vmatpush1.msra.mxu0 0.0
  %2220 = vmatprep.subr.mxu0 0.0
  %2221 = vmatpush1.msra.mxu0 0.0
  %2222 = vmatprep.subr.mxu0 0.0
  %2223 = vmatpush1.msra.mxu0 0.0
  %2224 = vmatprep.subr.mxu0 0.0
  %2225 = vmatpush1.msra.mxu0 0.0
  %2226 = vmatprep.subr.mxu0 0.0
  %2227 = vmatpush1.msra.mxu0 0.0
  %2228 = vmatprep.subr.mxu0 0.0
  %2229 = vmatpush1.msra.mxu0 0.0
  %2230 = vmatprep.subr.mxu0 0.0
  %2231 = vmatpush1.msra.mxu0 0.0
  %2232 = vmatprep.subr.mxu0 0.0
  %2233 = vmatpush1.msra.mxu0 0.0
  %2234 = vmatprep.subr.mxu0 0.0
  %2235 = vmatpush1.msra.mxu0 0.0
  %2236 = vmatprep.subr.mxu0 0.0
  %2237 = vmatpush1.msra.mxu0 0.0
  %2238 = vmatprep.subr.mxu0 0.0
  %2239 = vmatpush1.msra.mxu0 0.0
  %2240 = vmatprep.mubr.f32.mxu0 0.0
  %2241 = vmatmul.mubr.f32.gmra.mrb[0].mxu0 %v2174
  %v2242 = vpop.f32.mrb[0].mxu0
  %v2243 = vadd.f32 %v2170, %v2242
  %v2244 = vpop.f32.mrb[0].mxu0
  %2245 = vdwg.mxu0
  %vm2246 = vcmask 48128
  %2247 = vst.msk [vmem:[%s11] sm:$0xff] %vm2246, %v2243
  // Predicated region
  $region46: #{activity_classifier_forward.1} parent=0 // pred_check
    _
  $region47: #{activity_classifier_forward.1} parent=0 // pred_check_branch
    %2249 = sbr.rel (0) target = $region49
  $region48: #{activity_classifier_forward.1} parent=0 // pred_region
    _
  $region49: #{activity_classifier_forward.1} parent=0 // pred_fallthru
    _
  // Predicated region
  $region50: #{activity_classifier_forward.1} parent=0 // pred_check
    _
  $region51: #{activity_classifier_forward.1} parent=0 // pred_check_branch
    %2251 = sbr.rel (0) target = $region53
  $region52: #{activity_classifier_forward.1} parent=0 // pred_region
    _
  $region53: #{activity_classifier_forward.1} parent=0 // pred_fallthru
    _

</llo_original>
